<compile_context>
chip_gen: v7x
topology: tpu7x:2x2x1
jax: 0.10.0
libtpu: 0.0.40
codegen_flags: <defaults>
</compile_context>

<pallas_src>
import functools

import jax
import jax.numpy as jnp
from jax.experimental import pallas as pl
from jax.experimental.pallas import tpu as pltpu


# ----------------------------- model config (small synthetic BERT) -----------------------------
VOCAB      = 128
H          = 32       # hidden size
LAYERS     = 2
NH         = 2        # attention heads
DH         = 16       # head dim (H // NH)
INTER      = 64       # FFN intermediate
MAX_POS    = 16
TYPE_VOCAB = 2
NUM_LABELS = 3
LN_EPS     = 1e-12
LOGITS_PAD = 128      # lane-dense classifier width (sliced to NUM_LABELS in the wrapper)

# ----------------------------- packed parameter-slab layout -----------------------------
# Slab 1: embedding tables stacked along rows.
EMB_WORD = 0
EMB_POS  = VOCAB
EMB_TYPE = VOCAB + MAX_POS
EMB_ROWS = ((VOCAB + MAX_POS + TYPE_VOCAB + 7) // 8) * 8

# Slab 2: one 128-lane row per bias / LayerNorm vector.
VEC_EMB_LN_G, VEC_EMB_LN_B, VEC_POOLER_B, VEC_CLS_B = 0, 1, 2, 3
VEC_LAYER0    = 4
VEC_PER_LAYER = 8     # qkv_b, o_b, ln1_g, ln1_b, b1, b2, ln2_g, ln2_b
VEC_ROWS      = ((VEC_LAYER0 + LAYERS * VEC_PER_LAYER + 7) // 8) * 8

# Slab 3: matmul weights.
#   layer l : [l, :H, 0:3H] = qkv_w   [l, :H, 3H:4H]   = o_w
#             [l, :H, 4H:4H+I] = w1   [l, H:H+I, 0:H]  = w2
#   slot  L : [L, :H, 0:H] = pooler_w [L, :H, H:H+128] = cls_w (column-padded)
W_ROWS = H + INTER
W_COLS = 4 * H + INTER
assert H + LOGITS_PAD <= W_COLS


# ----------------------------- in-kernel helpers -----------------------------
def _layernorm(x, g, b, eps):
    mean = jnp.mean(x, axis=-1, keepdims=True)
    var = jnp.mean((x - mean) ** 2, axis=-1, keepdims=True)
    return (x - mean) * jax.lax.rsqrt(var + eps) * g + b


def _gelu(x):
    # tanh-approximate GELU.
    # TODO(synk): HF BertModel defaults to exact erf GELU; logits differ by ~1e-3 relative.
    return 0.5 * x * (1.0 + jnp.tanh(0.7978845608028654 * (x + 0.044715 * x * x * x)))


# ----------------------------- fused forward kernel -----------------------------
def _bert_fused_kernel(tok_ref, mask_ref, emb_ref, vec_ref, w_ref, logits_ref, ctx_ref,
                       *, batch, seq, batch_pad):
    B, S, Bp = batch, seq, batch_pad
    BS = B * S
    bf16 = jnp.bfloat16
    scale = 1.0 / (DH ** 0.5)

    def vec(row, width):                       # (1, width) f32 bias / LN vector
        return vec_ref[row:row + 1, 0:width]

    # ---- embeddings ----
    ids = tok_ref[:, 0:1]                                              # (BS, 1) int32
    ttf = tok_ref[:, 1:2].astype(jnp.float32)                          # (BS, 1) token-type in {0,1}

    # word embedding gather as a one-hot matmul (fine while VOCAB == 128, lane-dense)
    v_iota = jax.lax.broadcasted_iota(jnp.int32, (BS, VOCAB), 1)
    word_oh = (v_iota == ids).astype(bf16)
    x = jnp.dot(word_oh, emb_ref[EMB_WORD:EMB_WORD + VOCAB, :],
                preferred_element_type=jnp.float32)                    # (BS, H) f32

    # token-type: select between the two type rows (type_vocab == 2)
    type0 = emb_ref[EMB_TYPE:EMB_TYPE + 1, :].astype(jnp.float32)
    type1 = emb_ref[EMB_TYPE + 1:EMB_TYPE + 2, :].astype(jnp.float32)
    x = x + (1.0 - ttf) * type0 + ttf * type1

    # position: direct broadcast add of rows 0..S-1 (positions are statically 0..S-1, S <= MAX_POS)
    pos = emb_ref[EMB_POS:EMB_POS + S, :].astype(jnp.float32)          # (S, H)
    x = (x.reshape(B, S, H) + pos[None, :, :]).reshape(BS, H)

    x = _layernorm(x, vec(VEC_EMB_LN_G, H), vec(VEC_EMB_LN_B, H), LN_EPS)

    # additive attention mask built in-kernel from the raw (B, S) int mask
    add_mask = (1.0 - mask_ref[...].astype(jnp.float32)) * -10000.0    # (B, S)
    add_mask = add_mask[:, None, :]                                    # (B, 1, S_k)

    # ---- encoder layers (statically unrolled; everything VMEM/vreg resident) ----
    for l in range(LAYERS):
        base = VEC_LAYER0 + l * VEC_PER_LAYER
        qkv_w = w_ref[l, 0:H, 0:3 * H]                                 # (H, 3H)   bf16
        o_w   = w_ref[l, 0:H, 3 * H:4 * H]                             # (H, H)    bf16
        w1    = w_ref[l, 0:H, 4 * H:4 * H + INTER]                     # (H, I)    bf16
        w2    = w_ref[l, H:H + INTER, 0:H]                             # (I, H)    bf16

        # fused QKV projection: one (BS,H) x (H,3H) matmul, bf16 in / f32 accumulate
        qkv = jnp.dot(x.astype(bf16), qkv_w,
                      preferred_element_type=jnp.float32) + vec(base + 0, 3 * H)

        # per-head attention; head contexts written lane-wise into the VMEM scratch
        for h in range(NH):
            lo = h * DH
            q = qkv[:, lo:lo + DH].reshape(B, S, DH).astype(bf16)
            k = qkv[:, H + lo:H + lo + DH].reshape(B, S, DH).astype(bf16)
            v = qkv[:, 2 * H + lo:2 * H + lo + DH].reshape(B, S, DH).astype(bf16)

            s = jnp.einsum("bqd,bkd->bqk", q, k,
                           preferred_element_type=jnp.float32) * scale + add_mask
            # no max-subtraction: scaled scores are O(1), masked entries are -1e4 -> exp == 0
            p = jnp.exp(s)
            p = p * pl.reciprocal(jnp.sum(p, axis=-1, keepdims=True), approx=True)
            ctx = jnp.einsum("bqk,bkd->bqd", p.astype(bf16), v,
                             preferred_element_type=jnp.float32)       # (B, S, DH) f32
            ctx_ref[:, lo:lo + DH] = ctx.reshape(BS, DH)

        # ONE output projection for all heads
        attn = jnp.dot(ctx_ref[...].astype(bf16), o_w,
                       preferred_element_type=jnp.float32) + vec(base + 1, H)
        x = _layernorm(attn + x, vec(base + 2, H), vec(base + 3, H), LN_EPS)

        # feed-forward (GELU fused), bf16 matmuls / f32 elementwise
        ffn = _gelu(jnp.dot(x.astype(bf16), w1,
                            preferred_element_type=jnp.float32) + vec(base + 4, INTER))
        ffn = jnp.dot(ffn.astype(bf16), w2,
                      preferred_element_type=jnp.float32) + vec(base + 5, H)
        x = _layernorm(ffn + x, vec(base + 6, H), vec(base + 7, H), LN_EPS)

    # ---- pooler on CLS token + classifier (sublane/lane dense padded output) ----
    # gather the CLS rows (row b*S) into a sublane-dense (Bp, H) matrix via a one-hot matmul
    r = jax.lax.broadcasted_iota(jnp.int32, (Bp, BS), 0)
    c = jax.lax.broadcasted_iota(jnp.int32, (Bp, BS), 1)
    sel = (c == r * S).astype(bf16)                                    # rows >= B select nothing
    cls = jnp.dot(sel, x.astype(bf16), preferred_element_type=jnp.float32)   # (Bp, H)

    pooler_w = w_ref[LAYERS, 0:H, 0:H]                                 # (H, H)   bf16
    cls_w    = w_ref[LAYERS, 0:H, H:H + LOGITS_PAD]                    # (H, 128) bf16 (col-padded)
    pooled = jnp.tanh(jnp.dot(cls.astype(bf16), pooler_w,
                              preferred_element_type=jnp.float32) + vec(VEC_POOLER_B, H))
    # TODO(synk): nn.Dropout(0.3) on pooled_output is identity here (eval-mode forward);
    # training-mode dropout would use pltpu.prng_seed / pltpu.prng_random_bits.
    logits_ref[...] = jnp.dot(pooled.astype(bf16), cls_w,
                              preferred_element_type=jnp.float32) + vec(VEC_CLS_B, LOGITS_PAD)


# ----------------------------- parameter init + packing (deterministic) -----------------------------
def init_params(key):
    keys = iter(jax.random.split(key, 16))

    def dense(shape, scale=0.02):
        return scale * jax.random.normal(next(keys), shape, dtype=jnp.float32)

    p = dict(
        word_emb=dense((VOCAB, H)), pos_emb=dense((MAX_POS, H)), type_emb=dense((TYPE_VOCAB, H)),
        emb_ln_g=jnp.ones((H,), jnp.float32), emb_ln_b=jnp.zeros((H,), jnp.float32),
        qkv_w=dense((LAYERS, H, 3 * H)), qkv_b=jnp.zeros((LAYERS, 3 * H), jnp.float32),
        o_w=dense((LAYERS, H, H)), o_b=jnp.zeros((LAYERS, H), jnp.float32),
        ln1_g=jnp.ones((LAYERS, H), jnp.float32), ln1_b=jnp.zeros((LAYERS, H), jnp.float32),
        w1=dense((LAYERS, H, INTER)), b1=jnp.zeros((LAYERS, INTER), jnp.float32),
        w2=dense((LAYERS, INTER, H)), b2=jnp.zeros((LAYERS, H), jnp.float32),
        ln2_g=jnp.ones((LAYERS, H), jnp.float32), ln2_b=jnp.zeros((LAYERS, H), jnp.float32),
        pooler_w=dense((H, H)), pooler_b=jnp.zeros((H,), jnp.float32),
        cls_w=dense((H, NUM_LABELS)), cls_b=jnp.zeros((NUM_LABELS,), jnp.float32),
    )
    return pack_params(p)


def pack_params(p):
    # embedding slab (bf16)
    emb = jnp.zeros((EMB_ROWS, H), jnp.float32)
    emb = emb.at[EMB_WORD:EMB_WORD + VOCAB].set(p["word_emb"])
    emb = emb.at[EMB_POS:EMB_POS + MAX_POS].set(p["pos_emb"])
    emb = emb.at[EMB_TYPE:EMB_TYPE + TYPE_VOCAB].set(p["type_emb"])

    # bias / LayerNorm slab (f32, one 128-lane row per vector)
    vec = jnp.zeros((VEC_ROWS, 128), jnp.float32)
    vec = vec.at[VEC_EMB_LN_G, :H].set(p["emb_ln_g"])
    vec = vec.at[VEC_EMB_LN_B, :H].set(p["emb_ln_b"])
    vec = vec.at[VEC_POOLER_B, :H].set(p["pooler_b"])
    vec = vec.at[VEC_CLS_B, :NUM_LABELS].set(p["cls_b"])
    for l in range(LAYERS):
        base = VEC_LAYER0 + l * VEC_PER_LAYER
        vec = vec.at[base + 0, :3 * H].set(p["qkv_b"][l])
        vec = vec.at[base + 1, :H].set(p["o_b"][l])
        vec = vec.at[base + 2, :H].set(p["ln1_g"][l])
        vec = vec.at[base + 3, :H].set(p["ln1_b"][l])
        vec = vec.at[base + 4, :INTER].set(p["b1"][l])
        vec = vec.at[base + 5, :H].set(p["b2"][l])
        vec = vec.at[base + 6, :H].set(p["ln2_g"][l])
        vec = vec.at[base + 7, :H].set(p["ln2_b"][l])

    # matmul-weight slab (bf16)
    w = jnp.zeros((LAYERS + 1, W_ROWS, W_COLS), jnp.float32)
    for l in range(LAYERS):
        w = w.at[l, 0:H, 0:3 * H].set(p["qkv_w"][l])
        w = w.at[l, 0:H, 3 * H:4 * H].set(p["o_w"][l])
        w = w.at[l, 0:H, 4 * H:4 * H + INTER].set(p["w1"][l])
        w = w.at[l, H:H + INTER, 0:H].set(p["w2"][l])
    w = w.at[LAYERS, 0:H, 0:H].set(p["pooler_w"])
    w = w.at[LAYERS, 0:H, H:H + NUM_LABELS].set(p["cls_w"])

    return dict(emb=emb.astype(jnp.bfloat16), vec=vec, w=w.astype(jnp.bfloat16))


# ----------------------------- forward pass (single pallas_call) -----------------------------
@jax.jit
def bert_for_multilabel_forward(params, input_ids, attention_mask, token_type_ids=None):
    B, S = input_ids.shape
    assert S <= MAX_POS, "sequence length exceeds max_position_embeddings"
    BS = B * S
    Bp = max(8, ((B + 7) // 8) * 8)      # sublane-dense logits rows

    if token_type_ids is None:
        token_type_ids = jnp.zeros_like(input_ids)

    # pack both integer token streams into one (BS, 2) operand; raw (B, S) mask passed as-is
    tok = jnp.stack([input_ids.reshape(BS), token_type_ids.reshape(BS)], axis=-1).astype(jnp.int32)
    mask = attention_mask.astype(jnp.int32)

    kernel = functools.partial(_bert_fused_kernel, batch=B, seq=S, batch_pad=Bp)
    logits_pad = pl.pallas_call(
        kernel,
        out_shape=jax.ShapeDtypeStruct((Bp, LOGITS_PAD), jnp.float32),
        scratch_shapes=[pltpu.VMEM((BS, H), jnp.float32)],   # per-layer head-context assembly
    )(tok, mask, params["emb"], params["vec"], params["w"])

    return logits_pad[:B, :NUM_LABELS]


# ----------------------------- main -----------------------------
if __name__ == "__main__":
    key = jax.random.PRNGKey(0)
    pkey, ikey = jax.random.split(key)

    params = init_params(pkey)

    B, S = 2, 8
    input_ids = jax.random.randint(ikey, (B, S), 0, VOCAB, dtype=jnp.int32)
    attention_mask = jnp.ones((B, S), dtype=jnp.int32).at[1, 6:].set(0)   # pad tail of sample 1
    token_type_ids = jnp.zeros((B, S), dtype=jnp.int32)

    logits = bert_for_multilabel_forward(params, input_ids, attention_mask, token_type_ids)
    logits = jax.block_until_ready(logits)

    assert logits.shape == (B, NUM_LABELS)
    assert logits.dtype == jnp.float32
    assert bool(jnp.all(jnp.isfinite(logits)))
    print("KERNEL_OK")
</pallas_src>

<mosaic_0001>
module attributes {stable_mosaic.version = 11 : i64} {
  func.func @_bert_fused_kernel(%arg0: memref<16x2xi32, #tpu.memory_space<vmem>>, %arg1: memref<2x8xi32, #tpu.memory_space<vmem>>, %arg2: memref<152x32xbf16, #tpu.memory_space<vmem>>, %arg3: memref<24x128xf32, #tpu.memory_space<vmem>>, %arg4: memref<3x96x192xbf16, #tpu.memory_space<vmem>>, %arg5: memref<8x128xf32, #tpu.memory_space<vmem>>, %arg6: memref<16x32xf32, #tpu.memory_space<vmem>>) attributes {dimension_semantics = [], scalar_prefetch = 0 : i64, scratch_operands = 1 : i64, tpu.core_type = #tpu.core_type<tc>} {
    %c0 = arith.constant 0 : index
    %c0_0 = arith.constant 0 : index
    %0 = vector.load %arg0[%c0, %c0_0] : memref<16x2xi32, #tpu.memory_space<vmem>>, vector<16x1xi32>
    %c0_1 = arith.constant 0 : index
    %c1 = arith.constant 1 : index
    %1 = vector.load %arg0[%c0_1, %c1] : memref<16x2xi32, #tpu.memory_space<vmem>>, vector<16x1xi32>
    %2 = arith.sitofp %1 : vector<16x1xi32> to vector<16x1xf32>
    %3 = tpu.iota {dimensions = array<i32: 1>} : vector<16x128xi32>
    %4 = vector.broadcast %0 : vector<16x1xi32> to vector<16x128xi32>
    %5 = arith.cmpi eq, %3, %4 : vector<16x128xi32>
    %6 = arith.extui %5 : vector<16x128xi1> to vector<16x128xi32>
    %7 = arith.sitofp %6 : vector<16x128xi32> to vector<16x128xf32>
    %8 = arith.truncf %7 : vector<16x128xf32> to vector<16x128xbf16>
    %c0_2 = arith.constant 0 : index
    %c0_3 = arith.constant 0 : index
    %9 = vector.load %arg2[%c0_2, %c0_3] : memref<152x32xbf16, #tpu.memory_space<vmem>>, vector<128x32xbf16>
    %cst = arith.constant dense<0.000000e+00> : vector<16x32xf32>
    %10 = tpu.matmul %8, %9, %cst {dimension_numbers = #tpu.dot_dimension_numbers<[1], [0], [0], [1], [0, 0, 1, 1], [], []>} : vector<16x128xbf16>, vector<128x32xbf16>, vector<16x32xf32> -> vector<16x32xf32>
    %c144 = arith.constant 144 : index
    %c0_4 = arith.constant 0 : index
    %11 = vector.load %arg2[%c144, %c0_4] : memref<152x32xbf16, #tpu.memory_space<vmem>>, vector<1x32xbf16>
    %12 = arith.extf %11 : vector<1x32xbf16> to vector<1x32xf32>
    %c145 = arith.constant 145 : index
    %c0_5 = arith.constant 0 : index
    %13 = vector.load %arg2[%c145, %c0_5] : memref<152x32xbf16, #tpu.memory_space<vmem>>, vector<1x32xbf16>
    %14 = arith.extf %13 : vector<1x32xbf16> to vector<1x32xf32>
    %cst_6 = arith.constant 1.000000e+00 : f32
    %15 = vector.broadcast %cst_6 : f32 to vector<16x1xf32>
    %16 = arith.subf %15, %2 : vector<16x1xf32>
    %17 = vector.broadcast %16 : vector<16x1xf32> to vector<16x32xf32>
    %18 = vector.broadcast %12 : vector<1x32xf32> to vector<16x32xf32>
    %19 = arith.mulf %17, %18 : vector<16x32xf32>
    %20 = arith.addf %10, %19 : vector<16x32xf32>
    %21 = vector.broadcast %2 : vector<16x1xf32> to vector<16x32xf32>
    %22 = vector.broadcast %14 : vector<1x32xf32> to vector<16x32xf32>
    %23 = arith.mulf %21, %22 : vector<16x32xf32>
    %24 = arith.addf %20, %23 : vector<16x32xf32>
    %c128 = arith.constant 128 : index
    %c0_7 = arith.constant 0 : index
    %25 = vector.load %arg2[%c128, %c0_7] : memref<152x32xbf16, #tpu.memory_space<vmem>>, vector<8x32xbf16>
    %26 = arith.extf %25 : vector<8x32xbf16> to vector<8x32xf32>
    %27 = vector.shape_cast %24 : vector<16x32xf32> to vector<2x8x32xf32>
    %28 = vector.shape_cast %26 : vector<8x32xf32> to vector<1x8x32xf32>
    %29 = vector.broadcast %28 : vector<1x8x32xf32> to vector<2x8x32xf32>
    %30 = arith.addf %27, %29 : vector<2x8x32xf32>
    %31 = vector.shape_cast %30 : vector<2x8x32xf32> to vector<16x32xf32>
    %c0_8 = arith.constant 0 : index
    %c0_9 = arith.constant 0 : index
    %32 = vector.load %arg3[%c0_8, %c0_9] : memref<24x128xf32, #tpu.memory_space<vmem>>, vector<1x32xf32>
    %c1_10 = arith.constant 1 : index
    %c0_11 = arith.constant 0 : index
    %33 = vector.load %arg3[%c1_10, %c0_11] : memref<24x128xf32, #tpu.memory_space<vmem>>, vector<1x32xf32>
    %cst_12 = arith.constant dense<0.000000e+00> : vector<16xf32>
    %34 = vector.multi_reduction <add>, %31, %cst_12 [1] : vector<16x32xf32> to vector<16xf32>
    %35 = vector.shape_cast %34 : vector<16xf32> to vector<16x1xf32>
    %cst_13 = arith.constant 3.200000e+01 : f32
    %36 = vector.broadcast %cst_13 : f32 to vector<16x1xf32>
    %37 = arith.divf %35, %36 : vector<16x1xf32>
    %38 = vector.broadcast %37 : vector<16x1xf32> to vector<16x32xf32>
    %39 = arith.subf %31, %38 : vector<16x32xf32>
    %40 = arith.mulf %39, %39 : vector<16x32xf32>
    %cst_14 = arith.constant dense<0.000000e+00> : vector<16xf32>
    %41 = vector.multi_reduction <add>, %40, %cst_14 [1] : vector<16x32xf32> to vector<16xf32>
    %42 = vector.shape_cast %41 : vector<16xf32> to vector<16x1xf32>
    %cst_15 = arith.constant 3.200000e+01 : f32
    %43 = vector.broadcast %cst_15 : f32 to vector<16x1xf32>
    %44 = arith.divf %42, %43 : vector<16x1xf32>
    %45 = vector.broadcast %37 : vector<16x1xf32> to vector<16x32xf32>
    %46 = arith.subf %31, %45 : vector<16x32xf32>
    %cst_16 = arith.constant 9.99999996E-13 : f32
    %47 = vector.broadcast %cst_16 : f32 to vector<16x1xf32>
    %48 = arith.addf %44, %47 : vector<16x1xf32>
    %49 = math.rsqrt %48 : vector<16x1xf32>
    %50 = vector.broadcast %49 : vector<16x1xf32> to vector<16x32xf32>
    %51 = arith.mulf %46, %50 : vector<16x32xf32>
    %52 = vector.broadcast %32 : vector<1x32xf32> to vector<16x32xf32>
    %53 = arith.mulf %51, %52 : vector<16x32xf32>
    %54 = vector.broadcast %33 : vector<1x32xf32> to vector<16x32xf32>
    %55 = arith.addf %53, %54 : vector<16x32xf32>
    %c0_17 = arith.constant 0 : index
    %c0_18 = arith.constant 0 : index
    %56 = vector.load %arg1[%c0_17, %c0_18] : memref<2x8xi32, #tpu.memory_space<vmem>>, vector<2x8xi32>
    %57 = arith.sitofp %56 : vector<2x8xi32> to vector<2x8xf32>
    %cst_19 = arith.constant 1.000000e+00 : f32
    %58 = vector.broadcast %cst_19 : f32 to vector<2x8xf32>
    %59 = arith.subf %58, %57 : vector<2x8xf32>
    %cst_20 = arith.constant -1.000000e+04 : f32
    %60 = vector.broadcast %cst_20 : f32 to vector<2x8xf32>
    %61 = arith.mulf %59, %60 : vector<2x8xf32>
    %62 = vector.shape_cast %61 : vector<2x8xf32> to vector<2x1x8xf32>
    %c0_21 = arith.constant 0 : index
    %c0_22 = arith.constant 0 : index
    %c0_23 = arith.constant 0 : index
    %63 = vector.load %arg4[%c0_21, %c0_22, %c0_23] : memref<3x96x192xbf16, #tpu.memory_space<vmem>>, vector<1x32x96xbf16>
    %64 = vector.shape_cast %63 : vector<1x32x96xbf16> to vector<32x96xbf16>
    %c0_24 = arith.constant 0 : index
    %c0_25 = arith.constant 0 : index
    %c96 = arith.constant 96 : index
    %65 = vector.load %arg4[%c0_24, %c0_25, %c96] : memref<3x96x192xbf16, #tpu.memory_space<vmem>>, vector<1x32x32xbf16>
    %66 = vector.shape_cast %65 : vector<1x32x32xbf16> to vector<32x32xbf16>
    %c0_26 = arith.constant 0 : index
    %c0_27 = arith.constant 0 : index
    %c128_28 = arith.constant 128 : index
    %67 = vector.load %arg4[%c0_26, %c0_27, %c128_28] : memref<3x96x192xbf16, #tpu.memory_space<vmem>>, vector<1x32x64xbf16>
    %68 = vector.shape_cast %67 : vector<1x32x64xbf16> to vector<32x64xbf16>
    %c0_29 = arith.constant 0 : index
    %c32 = arith.constant 32 : index
    %c0_30 = arith.constant 0 : index
    %69 = vector.load %arg4[%c0_29, %c32, %c0_30] : memref<3x96x192xbf16, #tpu.memory_space<vmem>>, vector<1x64x32xbf16>
    %70 = vector.shape_cast %69 : vector<1x64x32xbf16> to vector<64x32xbf16>
    %71 = arith.truncf %55 : vector<16x32xf32> to vector<16x32xbf16>
    %cst_31 = arith.constant dense<0.000000e+00> : vector<16x96xf32>
    %72 = tpu.matmul %71, %64, %cst_31 {dimension_numbers = #tpu.dot_dimension_numbers<[1], [0], [0], [1], [0, 0, 1, 1], [], []>} : vector<16x32xbf16>, vector<32x96xbf16>, vector<16x96xf32> -> vector<16x96xf32>
    %c4 = arith.constant 4 : index
    %c0_32 = arith.constant 0 : index
    %73 = vector.load %arg3[%c4, %c0_32] : memref<24x128xf32, #tpu.memory_space<vmem>>, vector<1x96xf32>
    %74 = vector.broadcast %73 : vector<1x96xf32> to vector<16x96xf32>
    %75 = arith.addf %72, %74 : vector<16x96xf32>
    %76 = vector.extract_strided_slice %75 {offsets = [0, 0], sizes = [16, 16], strides = [1, 1]} : vector<16x96xf32> to vector<16x16xf32>
    %77 = vector.shape_cast %76 : vector<16x16xf32> to vector<2x8x16xf32>
    %78 = arith.truncf %77 : vector<2x8x16xf32> to vector<2x8x16xbf16>
    %79 = vector.extract_strided_slice %75 {offsets = [0, 32], sizes = [16, 16], strides = [1, 1]} : vector<16x96xf32> to vector<16x16xf32>
    %80 = vector.shape_cast %79 : vector<16x16xf32> to vector<2x8x16xf32>
    %81 = arith.truncf %80 : vector<2x8x16xf32> to vector<2x8x16xbf16>
    %82 = vector.extract_strided_slice %75 {offsets = [0, 64], sizes = [16, 16], strides = [1, 1]} : vector<16x96xf32> to vector<16x16xf32>
    %83 = vector.shape_cast %82 : vector<16x16xf32> to vector<2x8x16xf32>
    %84 = arith.truncf %83 : vector<2x8x16xf32> to vector<2x8x16xbf16>
    "tpu.trace_start"() <{level = 10 : i32, message = "bqd,bkd->bqk"}> : () -> ()
    %cst_33 = arith.constant dense<0.000000e+00> : vector<2x8x8xf32>
    %85 = tpu.matmul %78, %81, %cst_33 {dimension_numbers = #tpu.dot_dimension_numbers<[2], [2], [1], [1], [0, 0, 0, 1, 1, 1], [0], [0]>} : vector<2x8x16xbf16>, vector<2x8x16xbf16>, vector<2x8x8xf32> -> vector<2x8x8xf32>
    "tpu.trace_stop"() : () -> ()
    %cst_34 = arith.constant 2.500000e-01 : f32
    %86 = vector.broadcast %cst_34 : f32 to vector<2x8x8xf32>
    %87 = arith.mulf %85, %86 : vector<2x8x8xf32>
    %88 = vector.broadcast %62 : vector<2x1x8xf32> to vector<2x8x8xf32>
    %89 = arith.addf %87, %88 : vector<2x8x8xf32>
    %90 = math.exp %89 : vector<2x8x8xf32>
    %cst_35 = arith.constant dense<0.000000e+00> : vector<2x8xf32>
    %91 = vector.multi_reduction <add>, %90, %cst_35 [2] : vector<2x8x8xf32> to vector<2x8xf32>
    %92 = vector.shape_cast %91 : vector<2x8xf32> to vector<2x8x1xf32>
    %93 = tpu.reciprocal %92 {approx = true} : vector<2x8x1xf32> -> vector<2x8x1xf32>
    %94 = vector.broadcast %93 : vector<2x8x1xf32> to vector<2x8x8xf32>
    %95 = arith.mulf %90, %94 : vector<2x8x8xf32>
    %96 = arith.truncf %95 : vector<2x8x8xf32> to vector<2x8x8xbf16>
    "tpu.trace_start"() <{level = 10 : i32, message = "bqk,bkd->bqd"}> : () -> ()
    %cst_36 = arith.constant dense<0.000000e+00> : vector<2x8x16xf32>
    %97 = tpu.matmul %96, %84, %cst_36 {dimension_numbers = #tpu.dot_dimension_numbers<[2], [1], [1], [2], [0, 0, 0, 1, 1, 2], [0], [0]>} : vector<2x8x8xbf16>, vector<2x8x16xbf16>, vector<2x8x16xf32> -> vector<2x8x16xf32>
    "tpu.trace_stop"() : () -> ()
    %98 = vector.shape_cast %97 : vector<2x8x16xf32> to vector<16x16xf32>
    %c0_37 = arith.constant 0 : index
    %c0_38 = arith.constant 0 : index
    %99 = vector.load %arg6[%c0_37, %c0_38] : memref<16x32xf32, #tpu.memory_space<vmem>>, vector<16x16xf32>
    tpu.vector_store %arg6[%c0_37, %c0_38], %98 {strides = array<i32>} : memref<16x32xf32, #tpu.memory_space<vmem>>, vector<16x16xf32>,
    %100 = vector.extract_strided_slice %75 {offsets = [0, 16], sizes = [16, 16], strides = [1, 1]} : vector<16x96xf32> to vector<16x16xf32>
    %101 = vector.shape_cast %100 : vector<16x16xf32> to vector<2x8x16xf32>
    %102 = arith.truncf %101 : vector<2x8x16xf32> to vector<2x8x16xbf16>
    %103 = vector.extract_strided_slice %75 {offsets = [0, 48], sizes = [16, 16], strides = [1, 1]} : vector<16x96xf32> to vector<16x16xf32>
    %104 = vector.shape_cast %103 : vector<16x16xf32> to vector<2x8x16xf32>
    %105 = arith.truncf %104 : vector<2x8x16xf32> to vector<2x8x16xbf16>
    %106 = vector.extract_strided_slice %75 {offsets = [0, 80], sizes = [16, 16], strides = [1, 1]} : vector<16x96xf32> to vector<16x16xf32>
    %107 = vector.shape_cast %106 : vector<16x16xf32> to vector<2x8x16xf32>
    %108 = arith.truncf %107 : vector<2x8x16xf32> to vector<2x8x16xbf16>
    "tpu.trace_start"() <{level = 10 : i32, message = "bqd,bkd->bqk"}> : () -> ()
    %cst_39 = arith.constant dense<0.000000e+00> : vector<2x8x8xf32>
    %109 = tpu.matmul %102, %105, %cst_39 {dimension_numbers = #tpu.dot_dimension_numbers<[2], [2], [1], [1], [0, 0, 0, 1, 1, 1], [0], [0]>} : vector<2x8x16xbf16>, vector<2x8x16xbf16>, vector<2x8x8xf32> -> vector<2x8x8xf32>
    "tpu.trace_stop"() : () -> ()
    %cst_40 = arith.constant 2.500000e-01 : f32
    %110 = vector.broadcast %cst_40 : f32 to vector<2x8x8xf32>
    %111 = arith.mulf %109, %110 : vector<2x8x8xf32>
    %112 = vector.broadcast %62 : vector<2x1x8xf32> to vector<2x8x8xf32>
    %113 = arith.addf %111, %112 : vector<2x8x8xf32>
    %114 = math.exp %113 : vector<2x8x8xf32>
    %cst_41 = arith.constant dense<0.000000e+00> : vector<2x8xf32>
    %115 = vector.multi_reduction <add>, %114, %cst_41 [2] : vector<2x8x8xf32> to vector<2x8xf32>
    %116 = vector.shape_cast %115 : vector<2x8xf32> to vector<2x8x1xf32>
    %117 = tpu.reciprocal %116 {approx = true} : vector<2x8x1xf32> -> vector<2x8x1xf32>
    %118 = vector.broadcast %117 : vector<2x8x1xf32> to vector<2x8x8xf32>
    %119 = arith.mulf %114, %118 : vector<2x8x8xf32>
    %120 = arith.truncf %119 : vector<2x8x8xf32> to vector<2x8x8xbf16>
    "tpu.trace_start"() <{level = 10 : i32, message = "bqk,bkd->bqd"}> : () -> ()
    %cst_42 = arith.constant dense<0.000000e+00> : vector<2x8x16xf32>
    %121 = tpu.matmul %120, %108, %cst_42 {dimension_numbers = #tpu.dot_dimension_numbers<[2], [1], [1], [2], [0, 0, 0, 1, 1, 2], [0], [0]>} : vector<2x8x8xbf16>, vector<2x8x16xbf16>, vector<2x8x16xf32> -> vector<2x8x16xf32>
    "tpu.trace_stop"() : () -> ()
    %122 = vector.shape_cast %121 : vector<2x8x16xf32> to vector<16x16xf32>
    %c0_43 = arith.constant 0 : index
    %c16 = arith.constant 16 : index
    %123 = vector.load %arg6[%c0_43, %c16] : memref<16x32xf32, #tpu.memory_space<vmem>>, vector<16x16xf32>
    tpu.vector_store %arg6[%c0_43, %c16], %122 {strides = array<i32>} : memref<16x32xf32, #tpu.memory_space<vmem>>, vector<16x16xf32>,
    %c0_44 = arith.constant 0 : index
    %c0_45 = arith.constant 0 : index
    %124 = vector.load %arg6[%c0_44, %c0_45] : memref<16x32xf32, #tpu.memory_space<vmem>>, vector<16x32xf32>
    %125 = arith.truncf %124 : vector<16x32xf32> to vector<16x32xbf16>
    %cst_46 = arith.constant dense<0.000000e+00> : vector<16x32xf32>
    %126 = tpu.matmul %125, %66, %cst_46 {dimension_numbers = #tpu.dot_dimension_numbers<[1], [0], [0], [1], [0, 0, 1, 1], [], []>} : vector<16x32xbf16>, vector<32x32xbf16>, vector<16x32xf32> -> vector<16x32xf32>
    %c5 = arith.constant 5 : index
    %c0_47 = arith.constant 0 : index
    %127 = vector.load %arg3[%c5, %c0_47] : memref<24x128xf32, #tpu.memory_space<vmem>>, vector<1x32xf32>
    %128 = vector.broadcast %127 : vector<1x32xf32> to vector<16x32xf32>
    %129 = arith.addf %126, %128 : vector<16x32xf32>
    %130 = arith.addf %129, %55 : vector<16x32xf32>
    %c6 = arith.constant 6 : index
    %c0_48 = arith.constant 0 : index
    %131 = vector.load %arg3[%c6, %c0_48] : memref<24x128xf32, #tpu.memory_space<vmem>>, vector<1x32xf32>
    %c7 = arith.constant 7 : index
    %c0_49 = arith.constant 0 : index
    %132 = vector.load %arg3[%c7, %c0_49] : memref<24x128xf32, #tpu.memory_space<vmem>>, vector<1x32xf32>
    %cst_50 = arith.constant dense<0.000000e+00> : vector<16xf32>
    %133 = vector.multi_reduction <add>, %130, %cst_50 [1] : vector<16x32xf32> to vector<16xf32>
    %134 = vector.shape_cast %133 : vector<16xf32> to vector<16x1xf32>
    %cst_51 = arith.constant 3.200000e+01 : f32
    %135 = vector.broadcast %cst_51 : f32 to vector<16x1xf32>
    %136 = arith.divf %134, %135 : vector<16x1xf32>
    %137 = vector.broadcast %136 : vector<16x1xf32> to vector<16x32xf32>
    %138 = arith.subf %130, %137 : vector<16x32xf32>
    %139 = arith.mulf %138, %138 : vector<16x32xf32>
    %cst_52 = arith.constant dense<0.000000e+00> : vector<16xf32>
    %140 = vector.multi_reduction <add>, %139, %cst_52 [1] : vector<16x32xf32> to vector<16xf32>
    %141 = vector.shape_cast %140 : vector<16xf32> to vector<16x1xf32>
    %cst_53 = arith.constant 3.200000e+01 : f32
    %142 = vector.broadcast %cst_53 : f32 to vector<16x1xf32>
    %143 = arith.divf %141, %142 : vector<16x1xf32>
    %144 = vector.broadcast %136 : vector<16x1xf32> to vector<16x32xf32>
    %145 = arith.subf %130, %144 : vector<16x32xf32>
    %cst_54 = arith.constant 9.99999996E-13 : f32
    %146 = vector.broadcast %cst_54 : f32 to vector<16x1xf32>
    %147 = arith.addf %143, %146 : vector<16x1xf32>
    %148 = math.rsqrt %147 : vector<16x1xf32>
    %149 = vector.broadcast %148 : vector<16x1xf32> to vector<16x32xf32>
    %150 = arith.mulf %145, %149 : vector<16x32xf32>
    %151 = vector.broadcast %131 : vector<1x32xf32> to vector<16x32xf32>
    %152 = arith.mulf %150, %151 : vector<16x32xf32>
    %153 = vector.broadcast %132 : vector<1x32xf32> to vector<16x32xf32>
    %154 = arith.addf %152, %153 : vector<16x32xf32>
    %155 = arith.truncf %154 : vector<16x32xf32> to vector<16x32xbf16>
    %cst_55 = arith.constant dense<0.000000e+00> : vector<16x64xf32>
    %156 = tpu.matmul %155, %68, %cst_55 {dimension_numbers = #tpu.dot_dimension_numbers<[1], [0], [0], [1], [0, 0, 1, 1], [], []>} : vector<16x32xbf16>, vector<32x64xbf16>, vector<16x64xf32> -> vector<16x64xf32>
    %c8 = arith.constant 8 : index
    %c0_56 = arith.constant 0 : index
    %157 = vector.load %arg3[%c8, %c0_56] : memref<24x128xf32, #tpu.memory_space<vmem>>, vector<1x64xf32>
    %158 = vector.broadcast %157 : vector<1x64xf32> to vector<16x64xf32>
    %159 = arith.addf %156, %158 : vector<16x64xf32>
    %cst_57 = arith.constant 5.000000e-01 : f32
    %160 = vector.broadcast %cst_57 : f32 to vector<16x64xf32>
    %161 = arith.mulf %160, %159 : vector<16x64xf32>
    %cst_58 = arith.constant 4.471500e-02 : f32
    %162 = vector.broadcast %cst_58 : f32 to vector<16x64xf32>
    %163 = arith.mulf %162, %159 : vector<16x64xf32>
    %164 = arith.mulf %163, %159 : vector<16x64xf32>
    %165 = arith.mulf %164, %159 : vector<16x64xf32>
    %166 = arith.addf %159, %165 : vector<16x64xf32>
    %cst_59 = arith.constant 0.797884583 : f32
    %167 = vector.broadcast %cst_59 : f32 to vector<16x64xf32>
    %168 = arith.mulf %167, %166 : vector<16x64xf32>
    %169 = math.tanh %168 : vector<16x64xf32>
    %cst_60 = arith.constant 1.000000e+00 : f32
    %170 = vector.broadcast %cst_60 : f32 to vector<16x64xf32>
    %171 = arith.addf %170, %169 : vector<16x64xf32>
    %172 = arith.mulf %161, %171 : vector<16x64xf32>
    %173 = arith.truncf %172 : vector<16x64xf32> to vector<16x64xbf16>
    %cst_61 = arith.constant dense<0.000000e+00> : vector<16x32xf32>
    %174 = tpu.matmul %173, %70, %cst_61 {dimension_numbers = #tpu.dot_dimension_numbers<[1], [0], [0], [1], [0, 0, 1, 1], [], []>} : vector<16x64xbf16>, vector<64x32xbf16>, vector<16x32xf32> -> vector<16x32xf32>
    %c9 = arith.constant 9 : index
    %c0_62 = arith.constant 0 : index
    %175 = vector.load %arg3[%c9, %c0_62] : memref<24x128xf32, #tpu.memory_space<vmem>>, vector<1x32xf32>
    %176 = vector.broadcast %175 : vector<1x32xf32> to vector<16x32xf32>
    %177 = arith.addf %174, %176 : vector<16x32xf32>
    %178 = arith.addf %177, %154 : vector<16x32xf32>
    %c10 = arith.constant 10 : index
    %c0_63 = arith.constant 0 : index
    %179 = vector.load %arg3[%c10, %c0_63] : memref<24x128xf32, #tpu.memory_space<vmem>>, vector<1x32xf32>
    %c11 = arith.constant 11 : index
    %c0_64 = arith.constant 0 : index
    %180 = vector.load %arg3[%c11, %c0_64] : memref<24x128xf32, #tpu.memory_space<vmem>>, vector<1x32xf32>
    %cst_65 = arith.constant dense<0.000000e+00> : vector<16xf32>
    %181 = vector.multi_reduction <add>, %178, %cst_65 [1] : vector<16x32xf32> to vector<16xf32>
    %182 = vector.shape_cast %181 : vector<16xf32> to vector<16x1xf32>
    %cst_66 = arith.constant 3.200000e+01 : f32
    %183 = vector.broadcast %cst_66 : f32 to vector<16x1xf32>
    %184 = arith.divf %182, %183 : vector<16x1xf32>
    %185 = vector.broadcast %184 : vector<16x1xf32> to vector<16x32xf32>
    %186 = arith.subf %178, %185 : vector<16x32xf32>
    %187 = arith.mulf %186, %186 : vector<16x32xf32>
    %cst_67 = arith.constant dense<0.000000e+00> : vector<16xf32>
    %188 = vector.multi_reduction <add>, %187, %cst_67 [1] : vector<16x32xf32> to vector<16xf32>
    %189 = vector.shape_cast %188 : vector<16xf32> to vector<16x1xf32>
    %cst_68 = arith.constant 3.200000e+01 : f32
    %190 = vector.broadcast %cst_68 : f32 to vector<16x1xf32>
    %191 = arith.divf %189, %190 : vector<16x1xf32>
    %192 = vector.broadcast %184 : vector<16x1xf32> to vector<16x32xf32>
    %193 = arith.subf %178, %192 : vector<16x32xf32>
    %cst_69 = arith.constant 9.99999996E-13 : f32
    %194 = vector.broadcast %cst_69 : f32 to vector<16x1xf32>
    %195 = arith.addf %191, %194 : vector<16x1xf32>
    %196 = math.rsqrt %195 : vector<16x1xf32>
    %197 = vector.broadcast %196 : vector<16x1xf32> to vector<16x32xf32>
    %198 = arith.mulf %193, %197 : vector<16x32xf32>
    %199 = vector.broadcast %179 : vector<1x32xf32> to vector<16x32xf32>
    %200 = arith.mulf %198, %199 : vector<16x32xf32>
    %201 = vector.broadcast %180 : vector<1x32xf32> to vector<16x32xf32>
    %202 = arith.addf %200, %201 : vector<16x32xf32>
    %c1_70 = arith.constant 1 : index
    %c0_71 = arith.constant 0 : index
    %c0_72 = arith.constant 0 : index
    %203 = vector.load %arg4[%c1_70, %c0_71, %c0_72] : memref<3x96x192xbf16, #tpu.memory_space<vmem>>, vector<1x32x96xbf16>
    %204 = vector.shape_cast %203 : vector<1x32x96xbf16> to vector<32x96xbf16>
    %c1_73 = arith.constant 1 : index
    %c0_74 = arith.constant 0 : index
    %c96_75 = arith.constant 96 : index
    %205 = vector.load %arg4[%c1_73, %c0_74, %c96_75] : memref<3x96x192xbf16, #tpu.memory_space<vmem>>, vector<1x32x32xbf16>
    %206 = vector.shape_cast %205 : vector<1x32x32xbf16> to vector<32x32xbf16>
    %c1_76 = arith.constant 1 : index
    %c0_77 = arith.constant 0 : index
    %c128_78 = arith.constant 128 : index
    %207 = vector.load %arg4[%c1_76, %c0_77, %c128_78] : memref<3x96x192xbf16, #tpu.memory_space<vmem>>, vector<1x32x64xbf16>
    %208 = vector.shape_cast %207 : vector<1x32x64xbf16> to vector<32x64xbf16>
    %c1_79 = arith.constant 1 : index
    %c32_80 = arith.constant 32 : index
    %c0_81 = arith.constant 0 : index
    %209 = vector.load %arg4[%c1_79, %c32_80, %c0_81] : memref<3x96x192xbf16, #tpu.memory_space<vmem>>, vector<1x64x32xbf16>
    %210 = vector.shape_cast %209 : vector<1x64x32xbf16> to vector<64x32xbf16>
    %211 = arith.truncf %202 : vector<16x32xf32> to vector<16x32xbf16>
    %cst_82 = arith.constant dense<0.000000e+00> : vector<16x96xf32>
    %212 = tpu.matmul %211, %204, %cst_82 {dimension_numbers = #tpu.dot_dimension_numbers<[1], [0], [0], [1], [0, 0, 1, 1], [], []>} : vector<16x32xbf16>, vector<32x96xbf16>, vector<16x96xf32> -> vector<16x96xf32>
    %c12 = arith.constant 12 : index
    %c0_83 = arith.constant 0 : index
    %213 = vector.load %arg3[%c12, %c0_83] : memref<24x128xf32, #tpu.memory_space<vmem>>, vector<1x96xf32>
    %214 = vector.broadcast %213 : vector<1x96xf32> to vector<16x96xf32>
    %215 = arith.addf %212, %214 : vector<16x96xf32>
    %216 = vector.extract_strided_slice %215 {offsets = [0, 0], sizes = [16, 16], strides = [1, 1]} : vector<16x96xf32> to vector<16x16xf32>
    %217 = vector.shape_cast %216 : vector<16x16xf32> to vector<2x8x16xf32>
    %218 = arith.truncf %217 : vector<2x8x16xf32> to vector<2x8x16xbf16>
    %219 = vector.extract_strided_slice %215 {offsets = [0, 32], sizes = [16, 16], strides = [1, 1]} : vector<16x96xf32> to vector<16x16xf32>
    %220 = vector.shape_cast %219 : vector<16x16xf32> to vector<2x8x16xf32>
    %221 = arith.truncf %220 : vector<2x8x16xf32> to vector<2x8x16xbf16>
    %222 = vector.extract_strided_slice %215 {offsets = [0, 64], sizes = [16, 16], strides = [1, 1]} : vector<16x96xf32> to vector<16x16xf32>
    %223 = vector.shape_cast %222 : vector<16x16xf32> to vector<2x8x16xf32>
    %224 = arith.truncf %223 : vector<2x8x16xf32> to vector<2x8x16xbf16>
    "tpu.trace_start"() <{level = 10 : i32, message = "bqd,bkd->bqk"}> : () -> ()
    %cst_84 = arith.constant dense<0.000000e+00> : vector<2x8x8xf32>
    %225 = tpu.matmul %218, %221, %cst_84 {dimension_numbers = #tpu.dot_dimension_numbers<[2], [2], [1], [1], [0, 0, 0, 1, 1, 1], [0], [0]>} : vector<2x8x16xbf16>, vector<2x8x16xbf16>, vector<2x8x8xf32> -> vector<2x8x8xf32>
    "tpu.trace_stop"() : () -> ()
    %cst_85 = arith.constant 2.500000e-01 : f32
    %226 = vector.broadcast %cst_85 : f32 to vector<2x8x8xf32>
    %227 = arith.mulf %225, %226 : vector<2x8x8xf32>
    %228 = vector.broadcast %62 : vector<2x1x8xf32> to vector<2x8x8xf32>
    %229 = arith.addf %227, %228 : vector<2x8x8xf32>
    %230 = math.exp %229 : vector<2x8x8xf32>
    %cst_86 = arith.constant dense<0.000000e+00> : vector<2x8xf32>
    %231 = vector.multi_reduction <add>, %230, %cst_86 [2] : vector<2x8x8xf32> to vector<2x8xf32>
    %232 = vector.shape_cast %231 : vector<2x8xf32> to vector<2x8x1xf32>
    %233 = tpu.reciprocal %232 {approx = true} : vector<2x8x1xf32> -> vector<2x8x1xf32>
    %234 = vector.broadcast %233 : vector<2x8x1xf32> to vector<2x8x8xf32>
    %235 = arith.mulf %230, %234 : vector<2x8x8xf32>
    %236 = arith.truncf %235 : vector<2x8x8xf32> to vector<2x8x8xbf16>
    "tpu.trace_start"() <{level = 10 : i32, message = "bqk,bkd->bqd"}> : () -> ()
    %cst_87 = arith.constant dense<0.000000e+00> : vector<2x8x16xf32>
    %237 = tpu.matmul %236, %224, %cst_87 {dimension_numbers = #tpu.dot_dimension_numbers<[2], [1], [1], [2], [0, 0, 0, 1, 1, 2], [0], [0]>} : vector<2x8x8xbf16>, vector<2x8x16xbf16>, vector<2x8x16xf32> -> vector<2x8x16xf32>
    "tpu.trace_stop"() : () -> ()
    %238 = vector.shape_cast %237 : vector<2x8x16xf32> to vector<16x16xf32>
    %c0_88 = arith.constant 0 : index
    %c0_89 = arith.constant 0 : index
    %239 = vector.load %arg6[%c0_88, %c0_89] : memref<16x32xf32, #tpu.memory_space<vmem>>, vector<16x16xf32>
    tpu.vector_store %arg6[%c0_88, %c0_89], %238 {strides = array<i32>} : memref<16x32xf32, #tpu.memory_space<vmem>>, vector<16x16xf32>,
    %240 = vector.extract_strided_slice %215 {offsets = [0, 16], sizes = [16, 16], strides = [1, 1]} : vector<16x96xf32> to vector<16x16xf32>
    %241 = vector.shape_cast %240 : vector<16x16xf32> to vector<2x8x16xf32>
    %242 = arith.truncf %241 : vector<2x8x16xf32> to vector<2x8x16xbf16>
    %243 = vector.extract_strided_slice %215 {offsets = [0, 48], sizes = [16, 16], strides = [1, 1]} : vector<16x96xf32> to vector<16x16xf32>
    %244 = vector.shape_cast %243 : vector<16x16xf32> to vector<2x8x16xf32>
    %245 = arith.truncf %244 : vector<2x8x16xf32> to vector<2x8x16xbf16>
    %246 = vector.extract_strided_slice %215 {offsets = [0, 80], sizes = [16, 16], strides = [1, 1]} : vector<16x96xf32> to vector<16x16xf32>
    %247 = vector.shape_cast %246 : vector<16x16xf32> to vector<2x8x16xf32>
    %248 = arith.truncf %247 : vector<2x8x16xf32> to vector<2x8x16xbf16>
    "tpu.trace_start"() <{level = 10 : i32, message = "bqd,bkd->bqk"}> : () -> ()
    %cst_90 = arith.constant dense<0.000000e+00> : vector<2x8x8xf32>
    %249 = tpu.matmul %242, %245, %cst_90 {dimension_numbers = #tpu.dot_dimension_numbers<[2], [2], [1], [1], [0, 0, 0, 1, 1, 1], [0], [0]>} : vector<2x8x16xbf16>, vector<2x8x16xbf16>, vector<2x8x8xf32> -> vector<2x8x8xf32>
    "tpu.trace_stop"() : () -> ()
    %cst_91 = arith.constant 2.500000e-01 : f32
    %250 = vector.broadcast %cst_91 : f32 to vector<2x8x8xf32>
    %251 = arith.mulf %249, %250 : vector<2x8x8xf32>
    %252 = vector.broadcast %62 : vector<2x1x8xf32> to vector<2x8x8xf32>
    %253 = arith.addf %251, %252 : vector<2x8x8xf32>
    %254 = math.exp %253 : vector<2x8x8xf32>
    %cst_92 = arith.constant dense<0.000000e+00> : vector<2x8xf32>
    %255 = vector.multi_reduction <add>, %254, %cst_92 [2] : vector<2x8x8xf32> to vector<2x8xf32>
    %256 = vector.shape_cast %255 : vector<2x8xf32> to vector<2x8x1xf32>
    %257 = tpu.reciprocal %256 {approx = true} : vector<2x8x1xf32> -> vector<2x8x1xf32>
    %258 = vector.broadcast %257 : vector<2x8x1xf32> to vector<2x8x8xf32>
    %259 = arith.mulf %254, %258 : vector<2x8x8xf32>
    %260 = arith.truncf %259 : vector<2x8x8xf32> to vector<2x8x8xbf16>
    "tpu.trace_start"() <{level = 10 : i32, message = "bqk,bkd->bqd"}> : () -> ()
    %cst_93 = arith.constant dense<0.000000e+00> : vector<2x8x16xf32>
    %261 = tpu.matmul %260, %248, %cst_93 {dimension_numbers = #tpu.dot_dimension_numbers<[2], [1], [1], [2], [0, 0, 0, 1, 1, 2], [0], [0]>} : vector<2x8x8xbf16>, vector<2x8x16xbf16>, vector<2x8x16xf32> -> vector<2x8x16xf32>
    "tpu.trace_stop"() : () -> ()
    %262 = vector.shape_cast %261 : vector<2x8x16xf32> to vector<16x16xf32>
    %c0_94 = arith.constant 0 : index
    %c16_95 = arith.constant 16 : index
    %263 = vector.load %arg6[%c0_94, %c16_95] : memref<16x32xf32, #tpu.memory_space<vmem>>, vector<16x16xf32>
    tpu.vector_store %arg6[%c0_94, %c16_95], %262 {strides = array<i32>} : memref<16x32xf32, #tpu.memory_space<vmem>>, vector<16x16xf32>,
    %c0_96 = arith.constant 0 : index
    %c0_97 = arith.constant 0 : index
    %264 = vector.load %arg6[%c0_96, %c0_97] : memref<16x32xf32, #tpu.memory_space<vmem>>, vector<16x32xf32>
    %265 = arith.truncf %264 : vector<16x32xf32> to vector<16x32xbf16>
    %cst_98 = arith.constant dense<0.000000e+00> : vector<16x32xf32>
    %266 = tpu.matmul %265, %206, %cst_98 {dimension_numbers = #tpu.dot_dimension_numbers<[1], [0], [0], [1], [0, 0, 1, 1], [], []>} : vector<16x32xbf16>, vector<32x32xbf16>, vector<16x32xf32> -> vector<16x32xf32>
    %c13 = arith.constant 13 : index
    %c0_99 = arith.constant 0 : index
    %267 = vector.load %arg3[%c13, %c0_99] : memref<24x128xf32, #tpu.memory_space<vmem>>, vector<1x32xf32>
    %268 = vector.broadcast %267 : vector<1x32xf32> to vector<16x32xf32>
    %269 = arith.addf %266, %268 : vector<16x32xf32>
    %270 = arith.addf %269, %202 : vector<16x32xf32>
    %c14 = arith.constant 14 : index
    %c0_100 = arith.constant 0 : index
    %271 = vector.load %arg3[%c14, %c0_100] : memref<24x128xf32, #tpu.memory_space<vmem>>, vector<1x32xf32>
    %c15 = arith.constant 15 : index
    %c0_101 = arith.constant 0 : index
    %272 = vector.load %arg3[%c15, %c0_101] : memref<24x128xf32, #tpu.memory_space<vmem>>, vector<1x32xf32>
    %cst_102 = arith.constant dense<0.000000e+00> : vector<16xf32>
    %273 = vector.multi_reduction <add>, %270, %cst_102 [1] : vector<16x32xf32> to vector<16xf32>
    %274 = vector.shape_cast %273 : vector<16xf32> to vector<16x1xf32>
    %cst_103 = arith.constant 3.200000e+01 : f32
    %275 = vector.broadcast %cst_103 : f32 to vector<16x1xf32>
    %276 = arith.divf %274, %275 : vector<16x1xf32>
    %277 = vector.broadcast %276 : vector<16x1xf32> to vector<16x32xf32>
    %278 = arith.subf %270, %277 : vector<16x32xf32>
    %279 = arith.mulf %278, %278 : vector<16x32xf32>
    %cst_104 = arith.constant dense<0.000000e+00> : vector<16xf32>
    %280 = vector.multi_reduction <add>, %279, %cst_104 [1] : vector<16x32xf32> to vector<16xf32>
    %281 = vector.shape_cast %280 : vector<16xf32> to vector<16x1xf32>
    %cst_105 = arith.constant 3.200000e+01 : f32
    %282 = vector.broadcast %cst_105 : f32 to vector<16x1xf32>
    %283 = arith.divf %281, %282 : vector<16x1xf32>
    %284 = vector.broadcast %276 : vector<16x1xf32> to vector<16x32xf32>
    %285 = arith.subf %270, %284 : vector<16x32xf32>
    %cst_106 = arith.constant 9.99999996E-13 : f32
    %286 = vector.broadcast %cst_106 : f32 to vector<16x1xf32>
    %287 = arith.addf %283, %286 : vector<16x1xf32>
    %288 = math.rsqrt %287 : vector<16x1xf32>
    %289 = vector.broadcast %288 : vector<16x1xf32> to vector<16x32xf32>
    %290 = arith.mulf %285, %289 : vector<16x32xf32>
    %291 = vector.broadcast %271 : vector<1x32xf32> to vector<16x32xf32>
    %292 = arith.mulf %290, %291 : vector<16x32xf32>
    %293 = vector.broadcast %272 : vector<1x32xf32> to vector<16x32xf32>
    %294 = arith.addf %292, %293 : vector<16x32xf32>
    %295 = arith.truncf %294 : vector<16x32xf32> to vector<16x32xbf16>
    %cst_107 = arith.constant dense<0.000000e+00> : vector<16x64xf32>
    %296 = tpu.matmul %295, %208, %cst_107 {dimension_numbers = #tpu.dot_dimension_numbers<[1], [0], [0], [1], [0, 0, 1, 1], [], []>} : vector<16x32xbf16>, vector<32x64xbf16>, vector<16x64xf32> -> vector<16x64xf32>
    %c16_108 = arith.constant 16 : index
    %c0_109 = arith.constant 0 : index
    %297 = vector.load %arg3[%c16_108, %c0_109] : memref<24x128xf32, #tpu.memory_space<vmem>>, vector<1x64xf32>
    %298 = vector.broadcast %297 : vector<1x64xf32> to vector<16x64xf32>
    %299 = arith.addf %296, %298 : vector<16x64xf32>
    %cst_110 = arith.constant 5.000000e-01 : f32
    %300 = vector.broadcast %cst_110 : f32 to vector<16x64xf32>
    %301 = arith.mulf %300, %299 : vector<16x64xf32>
    %cst_111 = arith.constant 4.471500e-02 : f32
    %302 = vector.broadcast %cst_111 : f32 to vector<16x64xf32>
    %303 = arith.mulf %302, %299 : vector<16x64xf32>
    %304 = arith.mulf %303, %299 : vector<16x64xf32>
    %305 = arith.mulf %304, %299 : vector<16x64xf32>
    %306 = arith.addf %299, %305 : vector<16x64xf32>
    %cst_112 = arith.constant 0.797884583 : f32
    %307 = vector.broadcast %cst_112 : f32 to vector<16x64xf32>
    %308 = arith.mulf %307, %306 : vector<16x64xf32>
    %309 = math.tanh %308 : vector<16x64xf32>
    %cst_113 = arith.constant 1.000000e+00 : f32
    %310 = vector.broadcast %cst_113 : f32 to vector<16x64xf32>
    %311 = arith.addf %310, %309 : vector<16x64xf32>
    %312 = arith.mulf %301, %311 : vector<16x64xf32>
    %313 = arith.truncf %312 : vector<16x64xf32> to vector<16x64xbf16>
    %cst_114 = arith.constant dense<0.000000e+00> : vector<16x32xf32>
    %314 = tpu.matmul %313, %210, %cst_114 {dimension_numbers = #tpu.dot_dimension_numbers<[1], [0], [0], [1], [0, 0, 1, 1], [], []>} : vector<16x64xbf16>, vector<64x32xbf16>, vector<16x32xf32> -> vector<16x32xf32>
    %c17 = arith.constant 17 : index
    %c0_115 = arith.constant 0 : index
    %315 = vector.load %arg3[%c17, %c0_115] : memref<24x128xf32, #tpu.memory_space<vmem>>, vector<1x32xf32>
    %316 = vector.broadcast %315 : vector<1x32xf32> to vector<16x32xf32>
    %317 = arith.addf %314, %316 : vector<16x32xf32>
    %318 = arith.addf %317, %294 : vector<16x32xf32>
    %c18 = arith.constant 18 : index
    %c0_116 = arith.constant 0 : index
    %319 = vector.load %arg3[%c18, %c0_116] : memref<24x128xf32, #tpu.memory_space<vmem>>, vector<1x32xf32>
    %c19 = arith.constant 19 : index
    %c0_117 = arith.constant 0 : index
    %320 = vector.load %arg3[%c19, %c0_117] : memref<24x128xf32, #tpu.memory_space<vmem>>, vector<1x32xf32>
    %cst_118 = arith.constant dense<0.000000e+00> : vector<16xf32>
    %321 = vector.multi_reduction <add>, %318, %cst_118 [1] : vector<16x32xf32> to vector<16xf32>
    %322 = vector.shape_cast %321 : vector<16xf32> to vector<16x1xf32>
    %cst_119 = arith.constant 3.200000e+01 : f32
    %323 = vector.broadcast %cst_119 : f32 to vector<16x1xf32>
    %324 = arith.divf %322, %323 : vector<16x1xf32>
    %325 = vector.broadcast %324 : vector<16x1xf32> to vector<16x32xf32>
    %326 = arith.subf %318, %325 : vector<16x32xf32>
    %327 = arith.mulf %326, %326 : vector<16x32xf32>
    %cst_120 = arith.constant dense<0.000000e+00> : vector<16xf32>
    %328 = vector.multi_reduction <add>, %327, %cst_120 [1] : vector<16x32xf32> to vector<16xf32>
    %329 = vector.shape_cast %328 : vector<16xf32> to vector<16x1xf32>
    %cst_121 = arith.constant 3.200000e+01 : f32
    %330 = vector.broadcast %cst_121 : f32 to vector<16x1xf32>
    %331 = arith.divf %329, %330 : vector<16x1xf32>
    %332 = vector.broadcast %324 : vector<16x1xf32> to vector<16x32xf32>
    %333 = arith.subf %318, %332 : vector<16x32xf32>
    %cst_122 = arith.constant 9.99999996E-13 : f32
    %334 = vector.broadcast %cst_122 : f32 to vector<16x1xf32>
    %335 = arith.addf %331, %334 : vector<16x1xf32>
    %336 = math.rsqrt %335 : vector<16x1xf32>
    %337 = vector.broadcast %336 : vector<16x1xf32> to vector<16x32xf32>
    %338 = arith.mulf %333, %337 : vector<16x32xf32>
    %339 = vector.broadcast %319 : vector<1x32xf32> to vector<16x32xf32>
    %340 = arith.mulf %338, %339 : vector<16x32xf32>
    %341 = vector.broadcast %320 : vector<1x32xf32> to vector<16x32xf32>
    %342 = arith.addf %340, %341 : vector<16x32xf32>
    %343 = tpu.iota {dimensions = array<i32: 0>} : vector<8x16xi32>
    %344 = tpu.iota {dimensions = array<i32: 1>} : vector<8x16xi32>
    %c8_i32 = arith.constant 8 : i32
    %345 = vector.broadcast %c8_i32 : i32 to vector<8x16xi32>
    %346 = arith.muli %343, %345 : vector<8x16xi32>
    %347 = arith.cmpi eq, %344, %346 : vector<8x16xi32>
    %348 = arith.extui %347 : vector<8x16xi1> to vector<8x16xi32>
    %349 = arith.sitofp %348 : vector<8x16xi32> to vector<8x16xf32>
    %350 = arith.truncf %349 : vector<8x16xf32> to vector<8x16xbf16>
    %351 = arith.truncf %342 : vector<16x32xf32> to vector<16x32xbf16>
    %cst_123 = arith.constant dense<0.000000e+00> : vector<8x32xf32>
    %352 = tpu.matmul %350, %351, %cst_123 {dimension_numbers = #tpu.dot_dimension_numbers<[1], [0], [0], [1], [0, 0, 1, 1], [], []>} : vector<8x16xbf16>, vector<16x32xbf16>, vector<8x32xf32> -> vector<8x32xf32>
    %c2 = arith.constant 2 : index
    %c0_124 = arith.constant 0 : index
    %c0_125 = arith.constant 0 : index
    %353 = vector.load %arg4[%c2, %c0_124, %c0_125] : memref<3x96x192xbf16, #tpu.memory_space<vmem>>, vector<1x32x32xbf16>
    %354 = vector.shape_cast %353 : vector<1x32x32xbf16> to vector<32x32xbf16>
    %c2_126 = arith.constant 2 : index
    %c0_127 = arith.constant 0 : index
    %c32_128 = arith.constant 32 : index
    %355 = vector.load %arg4[%c2_126, %c0_127, %c32_128] : memref<3x96x192xbf16, #tpu.memory_space<vmem>>, vector<1x32x128xbf16>
    %356 = vector.shape_cast %355 : vector<1x32x128xbf16> to vector<32x128xbf16>
    %357 = arith.truncf %352 : vector<8x32xf32> to vector<8x32xbf16>
    %cst_129 = arith.constant dense<0.000000e+00> : vector<8x32xf32>
    %358 = tpu.matmul %357, %354, %cst_129 {dimension_numbers = #tpu.dot_dimension_numbers<[1], [0], [0], [1], [0, 0, 1, 1], [], []>} : vector<8x32xbf16>, vector<32x32xbf16>, vector<8x32xf32> -> vector<8x32xf32>
    %c2_130 = arith.constant 2 : index
    %c0_131 = arith.constant 0 : index
    %359 = vector.load %arg3[%c2_130, %c0_131] : memref<24x128xf32, #tpu.memory_space<vmem>>, vector<1x32xf32>
    %360 = vector.broadcast %359 : vector<1x32xf32> to vector<8x32xf32>
    %361 = arith.addf %358, %360 : vector<8x32xf32>
    %362 = math.tanh %361 : vector<8x32xf32>
    %363 = arith.truncf %362 : vector<8x32xf32> to vector<8x32xbf16>
    %cst_132 = arith.constant dense<0.000000e+00> : vector<8x128xf32>
    %364 = tpu.matmul %363, %356, %cst_132 {dimension_numbers = #tpu.dot_dimension_numbers<[1], [0], [0], [1], [0, 0, 1, 1], [], []>} : vector<8x32xbf16>, vector<32x128xbf16>, vector<8x128xf32> -> vector<8x128xf32>
    %c3 = arith.constant 3 : index
    %c0_133 = arith.constant 0 : index
    %365 = vector.load %arg3[%c3, %c0_133] : memref<24x128xf32, #tpu.memory_space<vmem>>, vector<1x128xf32>
    %366 = vector.broadcast %365 : vector<1x128xf32> to vector<8x128xf32>
    %367 = arith.addf %364, %366 : vector<8x128xf32>
    %c0_134 = arith.constant 0 : index
    %c0_135 = arith.constant 0 : index
    %368 = vector.load %arg5[%c0_134, %c0_135] : memref<8x128xf32, #tpu.memory_space<vmem>>, vector<8x128xf32>
    tpu.vector_store %arg5[%c0_134, %c0_135], %367 {strides = array<i32>} : memref<8x128xf32, #tpu.memory_space<vmem>>, vector<8x128xf32>,
    return
  }
}

</mosaic_0001>

<llo_original>
// kernel: bert_for_multilabel_forward.1
$region0: #{bert_for_multilabel_forward.1}
  #allocation0 [shape = 'u32[]', space=smem, size = 0x4, offset = 0x4, fixed_abs, tag = 'smem constant byte address 0x4 - core index']
  #allocation1 [shape = 'u32[144,128]{1,0:T(1,128)}', space=vmem, size = 0x12000, scoped, tag = 'internal scratch']
  #allocation2 [shape = 'f32[16,32]{1,0:T(8,128)}', space=vmem, size = 0x2000, scoped, tag = 'scratch operand']
  %s0 = inlined_call_operand.vmem [shape: s32[16,2], index: 0, kind: input, shape index: {}]
  %s1 = inlined_call_operand.vmem [shape: s32[2,8], index: 1, kind: input, shape index: {}]
  %s2 = inlined_call_operand.vmem [shape: bf16[152,32], index: 2, kind: input, shape index: {}]
  %s3 = inlined_call_operand.vmem [shape: f32[24,128], index: 3, kind: input, shape index: {}]
  %s4 = inlined_call_operand.hbm [shape: bf16[3,96,192], index: 4, kind: input, shape index: {}]
  %s5 = inlined_call_operand.vmem [shape: f32[8,128], index: 5, kind: output, shape index: {}]
  %s6 = sld [smem:[#allocation0]]
  $region34: #{bert_for_multilabel_forward.1} parent=0
    _
  %s8 = ssub.s32 1, %s6
  %s9 = scalar_select 0, %s8, %s6
  $region1: #{bert_for_multilabel_forward.1} parent=0
    #allocation3 [shape = 'u8[147456]{0}', space=vmem, size = 0x24000, scoped, tag = 'input window, operand 4, single buffered']
    #allocation4 [shape = 's32[1]{0}', space=sflag, size = 0x4, scoped, tag = 'scoped memory for bert_for_multilabel_forward.1']
    %10 = vsyncpa [#allocation4], 0
    // Predicated region
    $region2: #{bert_for_multilabel_forward.1} parent=1 // pred_check
      _
    $region3: #{bert_for_multilabel_forward.1} parent=1 // pred_check_branch
      %12 = sbr.rel (0) target = $region5
    $region4: #{bert_for_multilabel_forward.1} parent=1 // pred_region
      _
    $region5: #{bert_for_multilabel_forward.1} parent=1 // pred_fallthru
      _
    // Predicated region
    $region6: #{bert_for_multilabel_forward.1} parent=1 // pred_check
      _
    $region7: #{bert_for_multilabel_forward.1} parent=1 // pred_check_branch
      %14 = sbr.rel (0) target = $region9
    $region8: #{bert_for_multilabel_forward.1} parent=1 // pred_region
      _
    $region9: #{bert_for_multilabel_forward.1} parent=1 // pred_fallthru
      _
    // Predicated region
    $region10: #{bert_for_multilabel_forward.1} parent=1 // pred_check
      _
    $region11: #{bert_for_multilabel_forward.1} parent=1 // pred_check_branch
      %16 = sbr.rel (0) target = $region13
    $region12: #{bert_for_multilabel_forward.1} parent=1 // pred_region
      _
    $region13: #{bert_for_multilabel_forward.1} parent=1 // pred_fallthru
      _
    // Predicated region
    $region14: #{bert_for_multilabel_forward.1} parent=1 // pred_check
      _
    $region15: #{bert_for_multilabel_forward.1} parent=1 // pred_check_branch
      %18 = sbr.rel (0) target = $region17
    $region16: #{bert_for_multilabel_forward.1} parent=1 // pred_region
      _
    $region17: #{bert_for_multilabel_forward.1} parent=1 // pred_fallthru
      _
    // Predicated region
    $region18: #{bert_for_multilabel_forward.1} parent=1 // pred_check
      _
    $region19: #{bert_for_multilabel_forward.1} parent=1 // pred_check_branch
      %20 = sbr.rel (0) target = $region21
    $region20: #{bert_for_multilabel_forward.1} parent=1 // pred_region
      %s22 = ssub.s32 4608, 4608
      %23 = vsyncadd [#allocation4], %s22
      %s24 = sshll.u32 [#allocation3], 4
      %s25 = int_to_ptr.vmem [resolvable:$true] %s24
      %30 = dma.hbm_to_vmem [thread:$0]  %s4, 4608, %s25, [#allocation4], 128, 128, 8
    $region21: #{bert_for_multilabel_forward.1} parent=1 // pred_fallthru
      _
    // Predicated region
    $region22: #{bert_for_multilabel_forward.1} parent=1 // pred_check
      _
    $region23: #{bert_for_multilabel_forward.1} parent=1 // pred_check_branch
      %32 = sbr.rel (0) target = $region25
    $region24: #{bert_for_multilabel_forward.1} parent=1 // pred_region
      %33 = dma.done [#allocation4], 4608
    $region25: #{bert_for_multilabel_forward.1} parent=1 // pred_fallthru
      _
    %v35 = vld [vmem:[%s0] sm:$0xff]
    %v36 = vld [vmem:[%s0 + $0x8] sm:$0xff]
    %v37 = vcvt.s32.f32 %v35
    %v38 = vcvt.s32.f32 %v36
    %v39 = vlaneseq
    %v40 = vand.u32 %v39, 127
    %41 = vset.pattern.permute.xlu0 0
    %42 = vperm.xlu0 %41, %v35
    %v43 = vpop.permute.xlu0 %42
    %44 = vset.pattern.permute.xlu0 0
    %45 = vperm.xlu0 %44, %v36
    %v46 = vpop.permute.xlu0 %45
    %vm47 = vcmp.eq.s32.totalorder %v40, %v43
    %vm48 = vcmp.eq.s32.totalorder %v40, %v46
    %v49 = vsel %vm47, 1, 0
    %v50 = vsel %vm48, 1, 0
    %v51 = vcvt.s32.f32 %v49
    %v52 = vcvt.s32.f32 %v50
    %v53 = vpack.c.bf16 %v52, %v51
    %v54 = vld [vmem:[%s2] sm:$0xf]
    %v55 = vld [vmem:[%s2 + $0x4] sm:$0xf]
    %v56 = vld [vmem:[%s2 + $0x8] sm:$0xf]
    %v57 = vld [vmem:[%s2 + $0xc] sm:$0xf]
    %v58 = vld [vmem:[%s2 + $0x10] sm:$0xf]
    %v59 = vld [vmem:[%s2 + $0x14] sm:$0xf]
    %v60 = vld [vmem:[%s2 + $0x18] sm:$0xf]
    %v61 = vld [vmem:[%s2 + $0x1c] sm:$0xf]
    %v62 = vld [vmem:[%s2 + $0x20] sm:$0xf]
    %v63 = vld [vmem:[%s2 + $0x24] sm:$0xf]
    %v64 = vld [vmem:[%s2 + $0x28] sm:$0xf]
    %v65 = vld [vmem:[%s2 + $0x2c] sm:$0xf]
    %v66 = vld [vmem:[%s2 + $0x30] sm:$0xf]
    %v67 = vld [vmem:[%s2 + $0x34] sm:$0xf]
    %v68 = vld [vmem:[%s2 + $0x38] sm:$0xf]
    %v69 = vld [vmem:[%s2 + $0x3c] sm:$0xf]
    %v70 = vld [vmem:[%s2 + $0x48] sm:$0x1]
    %v71 = vunpack.c.l.bf16 %v70
    %v72 = vsub.f32 1.0, %v37
    %v73 = vsub.f32 1.0, %v38
    %75 = vset.pattern.permute.xlu0 1
    %76 = vperm.xlu0 %75, %v72
    %v77 = vpop.permute.xlu0 %76
    %80 = vset.pattern.permute.xlu0 1
    %81 = vperm.xlu0 %80, %v73
    %v82 = vpop.permute.xlu0 %81
    %v84 = vlaneseq
    %v85 = vshrl.u32 %v84, 7
    %v86 = vsub.s32 0, %v85
    %v87 = vrot.slane %v71, %v86
    %v88 = vmul.f32 %v77, %v87
    %v89 = vmul.f32 %v82, %v87
    %v106 = vunpack.c.l.b16 %v54
    %v107 = vunpack.c.l.b16 %v55
    %v108 = vunpack.c.l.b16 %v56
    %v109 = vunpack.c.l.b16 %v57
    %v110 = vunpack.c.l.b16 %v58
    %v111 = vunpack.c.l.b16 %v59
    %v112 = vunpack.c.l.b16 %v60
    %v113 = vunpack.c.l.b16 %v61
    %v114 = vunpack.c.l.b16 %v62
    %v115 = vunpack.c.l.b16 %v63
    %v116 = vunpack.c.l.b16 %v64
    %v117 = vunpack.c.l.b16 %v65
    %v118 = vunpack.c.l.b16 %v66
    %v119 = vunpack.c.l.b16 %v67
    %v120 = vunpack.c.l.b16 %v68
    %v121 = vunpack.c.l.b16 %v69
    %v122 = vpack.c.b16 %v107, %v106
    %v123 = vpack.c.b16 %v109, %v108
    %v124 = vpack.c.b16 %v111, %v110
    %v125 = vpack.c.b16 %v113, %v112
    %v126 = vpack.c.b16 %v115, %v114
    %v127 = vpack.c.b16 %v117, %v116
    %v128 = vpack.c.b16 %v119, %v118
    %v129 = vpack.c.b16 %v121, %v120
    %138 = vmatprep.subr.bf16.mxu0 0
    %139 = vmatpush1.bf16.msra.mxu0 %v122
    %140 = vmatprep.subr.bf16.mxu0 0
    %141 = vmatpush1.bf16.msra.mxu0 %v123
    %142 = vmatprep.subr.bf16.mxu0 0
    %143 = vmatpush1.bf16.msra.mxu0 %v124
    %144 = vmatprep.subr.bf16.mxu0 0
    %145 = vmatpush1.bf16.msra.mxu0 %v125
    %146 = vmatprep.subr.bf16.mxu0 0
    %147 = vmatpush1.bf16.msra.mxu0 %v126
    %148 = vmatprep.subr.bf16.mxu0 0
    %149 = vmatpush1.bf16.msra.mxu0 %v127
    %150 = vmatprep.subr.bf16.mxu0 0
    %151 = vmatpush1.bf16.msra.mxu0 %v128
    %152 = vmatprep.subr.bf16.mxu0 0
    %153 = vmatpush1.bf16.msra.mxu0 %v129
    %154 = vmatprep.subr.bf16.mxu0 0
    %155 = vmatpush1.bf16.msra.mxu0 0
    %156 = vmatprep.subr.bf16.mxu0 0
    %157 = vmatpush1.bf16.msra.mxu0 0
    %158 = vmatprep.subr.bf16.mxu0 0
    %159 = vmatpush1.bf16.msra.mxu0 0
    %160 = vmatprep.subr.bf16.mxu0 0
    %161 = vmatpush1.bf16.msra.mxu0 0
    %162 = vmatprep.subr.bf16.mxu0 0
    %163 = vmatpush1.bf16.msra.mxu0 0
    %164 = vmatprep.subr.bf16.mxu0 0
    %165 = vmatpush1.bf16.msra.mxu0 0
    %166 = vmatprep.subr.bf16.mxu0 0
    %167 = vmatpush1.bf16.msra.mxu0 0
    %168 = vmatprep.subr.bf16.mxu0 0
    %169 = vmatpush1.bf16.msra.mxu0 0
    %170 = vmatprep.mubr.bf16.mxu0 0
    %171 = vmatmul.mubr.bf16.gmra.mrb[0].mxu0 %v53
    %v172 = vpop.f32.mrb[0].mxu0
    %v173 = vadd.f32 %v88, %v172
    %v174 = vpop.f32.mrb[0].mxu0
    %v175 = vpop.f32.mrb[0].mxu0
    %v176 = vadd.f32 %v89, %v175
    %v177 = vpop.f32.mrb[0].mxu0
    %178 = vdwg.mxu0
    %180 = vset.pattern.permute.xlu0 1
    %181 = vperm.xlu0 %180, %v37
    %v182 = vpop.permute.xlu0 %181
    %185 = vset.pattern.permute.xlu0 1
    %186 = vperm.xlu0 %185, %v38
    %v187 = vpop.permute.xlu0 %186
    %v189 = vlaneseq
    %v190 = vshrl.u32 %v189, 7
    %v191 = vsub.s32 1, %v190
    %v192 = vrot.slane %v71, %v191
    %v193 = vmul.f32 %v182, %v192
    %v194 = vmul.f32 %v187, %v192
    %v195 = vadd.f32 %v173, %v193
    %v196 = vadd.f32 %v176, %v194
    %v197 = vld [vmem:[%s2 + $0x40] sm:$0xf]
    %v198 = vunpack.c.l.bf16 %v197
    %v199 = vadd.f32 %v195, %v198
    %v200 = vadd.f32 %v196, %v198
    %v201 = vld [vmem:[%s3] sm:$0x1]
    %v202 = vld [vmem:[%s3 + $0x1] sm:$0x1]
    %vm203 = vcmask 261120
    %v204 = vsel %vm203, %v199, 0.0
    %205 = vadd.xlane.f32.xlu0 %v204
    %v206 = vpop.xlane.xlu0 %205
    %v207 = vsel %vm203, %v200, 0.0
    %208 = vadd.xlane.f32.xlu0 %v207
    %v209 = vpop.xlane.xlu0 %208
    %v210 = vrcp.pop 32.0
    %v211 = vmul.f32 %v206, %v210
    %v212 = vmul.f32 %v209, %v210
    %v213 = vsub.f32 %v199, %v211
    %v214 = vsub.f32 %v200, %v212
    %v215 = vmul.f32 %v213, %v213
    %v216 = vmul.f32 %v214, %v214
    %v217 = vsel %vm203, %v215, 0.0
    %218 = vadd.xlane.f32.xlu0 %v217
    %v219 = vpop.xlane.xlu0 %218
    %v220 = vsel %vm203, %v216, 0.0
    %221 = vadd.xlane.f32.xlu0 %v220
    %v222 = vpop.xlane.xlu0 %221
    %v223 = vmul.f32 %v219, %v210
    %v224 = vmul.f32 %v222, %v210
    %v225 = vadd.f32 %v223, 1e-12
    %v226 = vadd.f32 %v224, 1e-12
    %v227 = vrsqrt.pop %v225
    %v228 = vrsqrt.pop %v226
    %v229 = vmul.f32 %v213, %v227
    %v230 = vmul.f32 %v214, %v228
    %v231 = vlaneseq
    %v232 = vshrl.u32 %v231, 7
    %v233 = vsub.s32 0, %v232
    %v234 = vrot.slane %v201, %v233
    %v235 = vmul.f32 %v229, %v234
    %v236 = vmul.f32 %v230, %v234
    %v237 = vlaneseq
    %v238 = vshrl.u32 %v237, 7
    %v239 = vsub.s32 0, %v238
    %v240 = vrot.slane %v202, %v239
    %v241 = vadd.f32 %v235, %v240
    %v242 = vadd.f32 %v236, %v240
    %v243 = vld [vmem:[%s1] sm:$0x3]
    %v244 = vcvt.s32.f32 %v243
    %v245 = vsub.f32 1.0, %v244
    %v246 = vmul.f32 %v245, -10000.0
    %v249 = vunpack.c.l.s4 1966171168
    %v250 = vunpack.c.0.s8 %v249
    %v251 = vlaneseq
    %v252 = vshrl.u32 %v251, 7
    %v253 = vsub.s32 %v250, %v252
    %v254 = vrot.slane %v246, %v253
    %v255 = vcombine.high %v254, %v254
    %v257 = vunpack.c.l.s4 1966171168
    %v258 = vunpack.c.0.s8 %v257
    %v259 = vlaneseq
    %v260 = vshrl.u32 %v259, 7
    %v261 = vsub.s32 %v258, %v260
    %v262 = vrot.slane %v254, %v261
    %v264 = vunpack.c.l.s4 1966171168
    %v265 = vunpack.c.0.s8 %v264
    %v266 = vlaneseq
    %v267 = vshrl.u32 %v266, 7
    %v268 = vsub.s32 %v265, %v267
    %v269 = vrot.slane %v255, %v268
    %v270 = vld [vmem:[#allocation3] sm:$0xf]
    %v271 = vld [vmem:[#allocation3 + $0x8] sm:$0xf]
    %v272 = vld [vmem:[#allocation3 + $0x10] sm:$0xf]
    %v273 = vld [vmem:[#allocation3 + $0x18] sm:$0xf]
    %v274 = vld [vmem:[#allocation3 + $0x4] sm:$0xf]
    %v275 = vld [vmem:[#allocation3 + $0xc] sm:$0xf]
    %v276 = vld [vmem:[#allocation3 + $0x14] sm:$0xf]
    %v277 = vld [vmem:[#allocation3 + $0x1c] sm:$0xf]
    %v278 = vld [vmem:[#allocation3 + $0x20] sm:$0xf]
    %v279 = vld [vmem:[#allocation3 + $0x28] sm:$0xf]
    %v280 = vld [vmem:[#allocation3 + $0x30] sm:$0xf]
    %v281 = vld [vmem:[#allocation3 + $0x38] sm:$0xf]
    %v282 = vld [vmem:[#allocation3 + $0x40] sm:$0xf]
    %v283 = vld [vmem:[#allocation3 + $0x48] sm:$0xf]
    %v284 = vld [vmem:[#allocation3 + $0x50] sm:$0xf]
    %v285 = vld [vmem:[#allocation3 + $0x58] sm:$0xf]
    %v286 = vpack.c.bf16 %v242, %v241
    %v287 = vld [vmem:[%s3 + $0x4] sm:$0x1]
    %v288 = vlaneseq
    %v289 = vshrl.u32 %v288, 7
    %v290 = vsub.s32 0, %v289
    %v291 = vrot.slane %v287, %v290
    %v296 = vunpack.c.l.b16 %v270
    %v297 = vunpack.c.l.b16 %v271
    %v298 = vunpack.c.l.b16 %v272
    %v299 = vunpack.c.l.b16 %v273
    %v300 = vpack.c.b16 %v297, %v296
    %v301 = vpack.c.b16 %v299, %v298
    %v305 = vsel %vm203, %v286, 0
    %307 = vmatprep.subr.bf16.mxu0 0
    %308 = vmatpush1.bf16.msra.mxu0 %v300
    %309 = vmatprep.subr.bf16.mxu0 0
    %310 = vmatpush1.bf16.msra.mxu0 %v301
    %311 = vmatprep.subr.bf16.mxu0 0
    %312 = vmatpush1.bf16.msra.mxu0 0
    %313 = vmatprep.subr.bf16.mxu0 0
    %314 = vmatpush1.bf16.msra.mxu0 0
    %315 = vmatprep.subr.bf16.mxu0 0
    %316 = vmatpush1.bf16.msra.mxu0 0
    %317 = vmatprep.subr.bf16.mxu0 0
    %318 = vmatpush1.bf16.msra.mxu0 0
    %319 = vmatprep.subr.bf16.mxu0 0
    %320 = vmatpush1.bf16.msra.mxu0 0
    %321 = vmatprep.subr.bf16.mxu0 0
    %322 = vmatpush1.bf16.msra.mxu0 0
    %323 = vmatprep.subr.bf16.mxu0 0
    %324 = vmatpush1.bf16.msra.mxu0 0
    %325 = vmatprep.subr.bf16.mxu0 0
    %326 = vmatpush1.bf16.msra.mxu0 0
    %327 = vmatprep.subr.bf16.mxu0 0
    %328 = vmatpush1.bf16.msra.mxu0 0
    %329 = vmatprep.subr.bf16.mxu0 0
    %330 = vmatpush1.bf16.msra.mxu0 0
    %331 = vmatprep.subr.bf16.mxu0 0
    %332 = vmatpush1.bf16.msra.mxu0 0
    %333 = vmatprep.subr.bf16.mxu0 0
    %334 = vmatpush1.bf16.msra.mxu0 0
    %335 = vmatprep.subr.bf16.mxu0 0
    %336 = vmatpush1.bf16.msra.mxu0 0
    %337 = vmatprep.subr.bf16.mxu0 0
    %338 = vmatpush1.bf16.msra.mxu0 0
    %339 = vmatprep.mubr.bf16.mxu0 0
    %340 = vmatmul.mubr.bf16.gmra.mrb[0].mxu0 %v305
    %v341 = vpop.f32.mrb[0].mxu0
    %v342 = vadd.f32 %v291, %v341
    %v343 = vpop.f32.mrb[0].mxu0
    %v344 = vpop.f32.mrb[0].mxu0
    %v345 = vadd.f32 %v291, %v344
    %v346 = vpop.f32.mrb[0].mxu0
    %347 = vdwg.mxu0
    %v348 = vpack.c.bf16 %v342, %v342
    %v349 = vpack.c.bf16 %v345, %v345
    %351 = vrot.lane.b32.xlu0 %v348, 96
    %v352 = vpop.permute.xlu0 %351
    %vm353 = vcmask 130048
    %v355 = vsel %vm353, %v348, 0
    %v358 = vsel %vm353, %v352, 0
    %360 = vmatprep.subr.bf16.mxu0 0
    %361 = vmatpush1.bf16.xpose.msra.mxu0 %v358
    %362 = vmatprep.subr.bf16.mxu0 0
    %363 = vmatpush1.bf16.xpose.msra.mxu0 0
    %364 = vmatprep.subr.bf16.mxu0 0
    %365 = vmatpush1.bf16.xpose.msra.mxu0 0
    %366 = vmatprep.subr.bf16.mxu0 0
    %367 = vmatpush1.bf16.xpose.msra.mxu0 0
    %368 = vmatprep.subr.bf16.mxu0 0
    %369 = vmatpush1.bf16.xpose.msra.mxu0 0
    %370 = vmatprep.subr.bf16.mxu0 0
    %371 = vmatpush1.bf16.xpose.msra.mxu0 0
    %372 = vmatprep.subr.bf16.mxu0 0
    %373 = vmatpush1.bf16.xpose.msra.mxu0 0
    %374 = vmatprep.subr.bf16.mxu0 0
    %375 = vmatpush1.bf16.xpose.msra.mxu0 0
    %376 = vmatprep.subr.bf16.mxu0 0
    %377 = vmatpush1.bf16.xpose.msra.mxu0 0
    %378 = vmatprep.subr.bf16.mxu0 0
    %379 = vmatpush1.bf16.xpose.msra.mxu0 0
    %380 = vmatprep.subr.bf16.mxu0 0
    %381 = vmatpush1.bf16.xpose.msra.mxu0 0
    %382 = vmatprep.subr.bf16.mxu0 0
    %383 = vmatpush1.bf16.xpose.msra.mxu0 0
    %384 = vmatprep.subr.bf16.mxu0 0
    %385 = vmatpush1.bf16.xpose.msra.mxu0 0
    %386 = vmatprep.subr.bf16.mxu0 0
    %387 = vmatpush1.bf16.xpose.msra.mxu0 0
    %388 = vmatprep.subr.bf16.mxu0 0
    %389 = vmatpush1.bf16.xpose.msra.mxu0 0
    %390 = vmatprep.subr.bf16.mxu0 0
    %391 = vmatpush1.bf16.xpose.msra.mxu0 0
    %392 = vmatprep.mubr.bf16.mxu0 0
    %393 = vmatmul.mubr.bf16.gmra.mrb[0].mxu0 %v355
    %v394 = vpop.f32.mrb[0].mxu0
    %v395 = vadd.f32 0.0, %v394
    %v396 = vpop.f32.mrb[0].mxu0
    %v397 = vpop.f32.mrb[0].mxu0
    %v398 = vpop.f32.mrb[0].mxu0
    %399 = vdwg.mxu0
    %401 = vrot.lane.b32.xlu0 %v349, 96
    %v402 = vpop.permute.xlu0 %401
    %v404 = vsel %vm353, %v349, 0
    %v407 = vsel %vm353, %v402, 0
    %409 = vmatprep.subr.bf16.mxu0 0
    %410 = vmatpush1.bf16.xpose.msra.mxu0 %v407
    %411 = vmatprep.subr.bf16.mxu0 0
    %412 = vmatpush1.bf16.xpose.msra.mxu0 0
    %413 = vmatprep.subr.bf16.mxu0 0
    %414 = vmatpush1.bf16.xpose.msra.mxu0 0
    %415 = vmatprep.subr.bf16.mxu0 0
    %416 = vmatpush1.bf16.xpose.msra.mxu0 0
    %417 = vmatprep.subr.bf16.mxu0 0
    %418 = vmatpush1.bf16.xpose.msra.mxu0 0
    %419 = vmatprep.subr.bf16.mxu0 0
    %420 = vmatpush1.bf16.xpose.msra.mxu0 0
    %421 = vmatprep.subr.bf16.mxu0 0
    %422 = vmatpush1.bf16.xpose.msra.mxu0 0
    %423 = vmatprep.subr.bf16.mxu0 0
    %424 = vmatpush1.bf16.xpose.msra.mxu0 0
    %425 = vmatprep.subr.bf16.mxu0 0
    %426 = vmatpush1.bf16.xpose.msra.mxu0 0
    %427 = vmatprep.subr.bf16.mxu0 0
    %428 = vmatpush1.bf16.xpose.msra.mxu0 0
    %429 = vmatprep.subr.bf16.mxu0 0
    %430 = vmatpush1.bf16.xpose.msra.mxu0 0
    %431 = vmatprep.subr.bf16.mxu0 0
    %432 = vmatpush1.bf16.xpose.msra.mxu0 0
    %433 = vmatprep.subr.bf16.mxu0 0
    %434 = vmatpush1.bf16.xpose.msra.mxu0 0
    %435 = vmatprep.subr.bf16.mxu0 0
    %436 = vmatpush1.bf16.xpose.msra.mxu0 0
    %437 = vmatprep.subr.bf16.mxu0 0
    %438 = vmatpush1.bf16.xpose.msra.mxu0 0
    %439 = vmatprep.subr.bf16.mxu0 0
    %440 = vmatpush1.bf16.xpose.msra.mxu0 0
    %441 = vmatprep.mubr.bf16.mxu0 0
    %442 = vmatmul.mubr.bf16.gmra.mrb[0].mxu0 %v404
    %v443 = vpop.f32.mrb[0].mxu0
    %v444 = vadd.f32 0.0, %v443
    %v445 = vpop.f32.mrb[0].mxu0
    %v446 = vpop.f32.mrb[0].mxu0
    %v447 = vpop.f32.mrb[0].mxu0
    %448 = vdwg.mxu0
    %v449 = vmul.f32 %v395, 0.25
    %v450 = vmul.f32 %v444, 0.25
    %v451 = vlaneseq
    %v452 = vshrl.u32 %v451, 7
    %v453 = vsub.s32 0, %v452
    %v454 = vrot.slane %v262, %v453
    %v455 = vlaneseq
    %v456 = vshrl.u32 %v455, 7
    %v457 = vsub.s32 0, %v456
    %v458 = vrot.slane %v269, %v457
    %v461 = vadd.f32 %v449, %v454
    %v462 = vadd.f32 %v450, %v458
    %v463 = vmul.f32 %v461, 1.442695
    %v464 = vpow.pop %v463
    %v465 = vmul.f32 %v462, 1.442695
    %v466 = vpow.pop %v465
    %vm467 = vcmask 64512
    %v468 = vsel %vm467, %v464, 0.0
    %469 = vadd.xlane.f32.xlu0 %v468
    %v470 = vpop.xlane.xlu0 %469
    %v471 = vsel %vm467, %v466, 0.0
    %472 = vadd.xlane.f32.xlu0 %v471
    %v473 = vpop.xlane.xlu0 %472
    %v474 = vrcp.pop %v470
    %v475 = vrcp.pop %v473
    %v476 = vmul.f32 %v464, %v474
    %v477 = vmul.f32 %v466, %v475
    %v478 = vpack.c.bf16 %v476, %v476
    %v479 = vpack.c.bf16 %v477, %v477
    %480 = vrot.lane.b32.xlu0 %v348, 64
    %v481 = vpop.permute.xlu0 %480
    %v483 = vsel %vm467, %v478, 0
    %vm485 = vcmask 1043456
    %v487 = vsel %vm485, %v481, 0
    %489 = vmatprep.subr.bf16.mxu0 0
    %490 = vmatpush1.bf16.msra.mxu0 %v487
    %491 = vmatprep.subr.bf16.mxu0 0
    %492 = vmatpush1.bf16.msra.mxu0 0
    %493 = vmatprep.subr.bf16.mxu0 0
    %494 = vmatpush1.bf16.msra.mxu0 0
    %495 = vmatprep.subr.bf16.mxu0 0
    %496 = vmatpush1.bf16.msra.mxu0 0
    %497 = vmatprep.subr.bf16.mxu0 0
    %498 = vmatpush1.bf16.msra.mxu0 0
    %499 = vmatprep.subr.bf16.mxu0 0
    %500 = vmatpush1.bf16.msra.mxu0 0
    %501 = vmatprep.subr.bf16.mxu0 0
    %502 = vmatpush1.bf16.msra.mxu0 0
    %503 = vmatprep.subr.bf16.mxu0 0
    %504 = vmatpush1.bf16.msra.mxu0 0
    %505 = vmatprep.subr.bf16.mxu0 0
    %506 = vmatpush1.bf16.msra.mxu0 0
    %507 = vmatprep.subr.bf16.mxu0 0
    %508 = vmatpush1.bf16.msra.mxu0 0
    %509 = vmatprep.subr.bf16.mxu0 0
    %510 = vmatpush1.bf16.msra.mxu0 0
    %511 = vmatprep.subr.bf16.mxu0 0
    %512 = vmatpush1.bf16.msra.mxu0 0
    %513 = vmatprep.subr.bf16.mxu0 0
    %514 = vmatpush1.bf16.msra.mxu0 0
    %515 = vmatprep.subr.bf16.mxu0 0
    %516 = vmatpush1.bf16.msra.mxu0 0
    %517 = vmatprep.subr.bf16.mxu0 0
    %518 = vmatpush1.bf16.msra.mxu0 0
    %519 = vmatprep.subr.bf16.mxu0 0
    %520 = vmatpush1.bf16.msra.mxu0 0
    %521 = vmatprep.mubr.bf16.mxu0 0
    %522 = vmatmul.mubr.bf16.gmra.mrb[0].mxu0 %v483
    %v523 = vpop.f32.mrb[0].mxu0
    %v524 = vadd.f32 0.0, %v523
    %v525 = vpop.f32.mrb[0].mxu0
    %v526 = vpop.f32.mrb[0].mxu0
    %v527 = vpop.f32.mrb[0].mxu0
    %528 = vdwg.mxu0
    %529 = vrot.lane.b32.xlu0 %v349, 64
    %v530 = vpop.permute.xlu0 %529
    %v532 = vsel %vm467, %v479, 0
    %v535 = vsel %vm485, %v530, 0
    %537 = vmatprep.subr.bf16.mxu0 0
    %538 = vmatpush1.bf16.msra.mxu0 %v535
    %539 = vmatprep.subr.bf16.mxu0 0
    %540 = vmatpush1.bf16.msra.mxu0 0
    %541 = vmatprep.subr.bf16.mxu0 0
    %542 = vmatpush1.bf16.msra.mxu0 0
    %543 = vmatprep.subr.bf16.mxu0 0
    %544 = vmatpush1.bf16.msra.mxu0 0
    %545 = vmatprep.subr.bf16.mxu0 0
    %546 = vmatpush1.bf16.msra.mxu0 0
    %547 = vmatprep.subr.bf16.mxu0 0
    %548 = vmatpush1.bf16.msra.mxu0 0
    %549 = vmatprep.subr.bf16.mxu0 0
    %550 = vmatpush1.bf16.msra.mxu0 0
    %551 = vmatprep.subr.bf16.mxu0 0
    %552 = vmatpush1.bf16.msra.mxu0 0
    %553 = vmatprep.subr.bf16.mxu0 0
    %554 = vmatpush1.bf16.msra.mxu0 0
    %555 = vmatprep.subr.bf16.mxu0 0
    %556 = vmatpush1.bf16.msra.mxu0 0
    %557 = vmatprep.subr.bf16.mxu0 0
    %558 = vmatpush1.bf16.msra.mxu0 0
    %559 = vmatprep.subr.bf16.mxu0 0
    %560 = vmatpush1.bf16.msra.mxu0 0
    %561 = vmatprep.subr.bf16.mxu0 0
    %562 = vmatpush1.bf16.msra.mxu0 0
    %563 = vmatprep.subr.bf16.mxu0 0
    %564 = vmatpush1.bf16.msra.mxu0 0
    %565 = vmatprep.subr.bf16.mxu0 0
    %566 = vmatpush1.bf16.msra.mxu0 0
    %567 = vmatprep.subr.bf16.mxu0 0
    %568 = vmatpush1.bf16.msra.mxu0 0
    %569 = vmatprep.mubr.bf16.mxu0 0
    %570 = vmatmul.mubr.bf16.gmra.mrb[0].mxu0 %v532
    %v571 = vpop.f32.mrb[0].mxu0
    %v572 = vadd.f32 0.0, %v571
    %v573 = vpop.f32.mrb[0].mxu0
    %v574 = vpop.f32.mrb[0].mxu0
    %v575 = vpop.f32.mrb[0].mxu0
    %576 = vdwg.mxu0
    %577 = vst.msk [vmem:[#allocation2] sm:$0xff] %vm353, %v524
    %578 = vst.msk [vmem:[#allocation2 + $0x8] sm:$0xff] %vm353, %v572
    %579 = vrot.lane.b32.xlu0 %v348, 112
    %v580 = vpop.permute.xlu0 %579
    %581 = vrot.lane.b32.xlu0 %v348, 80
    %v582 = vpop.permute.xlu0 %581
    %v584 = vsel %vm353, %v580, 0
    %v587 = vsel %vm353, %v582, 0
    %589 = vmatprep.subr.bf16.mxu0 0
    %590 = vmatpush1.bf16.xpose.msra.mxu0 %v587
    %591 = vmatprep.subr.bf16.mxu0 0
    %592 = vmatpush1.bf16.xpose.msra.mxu0 0
    %593 = vmatprep.subr.bf16.mxu0 0
    %594 = vmatpush1.bf16.xpose.msra.mxu0 0
    %595 = vmatprep.subr.bf16.mxu0 0
    %596 = vmatpush1.bf16.xpose.msra.mxu0 0
    %597 = vmatprep.subr.bf16.mxu0 0
    %598 = vmatpush1.bf16.xpose.msra.mxu0 0
    %599 = vmatprep.subr.bf16.mxu0 0
    %600 = vmatpush1.bf16.xpose.msra.mxu0 0
    %601 = vmatprep.subr.bf16.mxu0 0
    %602 = vmatpush1.bf16.xpose.msra.mxu0 0
    %603 = vmatprep.subr.bf16.mxu0 0
    %604 = vmatpush1.bf16.xpose.msra.mxu0 0
    %605 = vmatprep.subr.bf16.mxu0 0
    %606 = vmatpush1.bf16.xpose.msra.mxu0 0
    %607 = vmatprep.subr.bf16.mxu0 0
    %608 = vmatpush1.bf16.xpose.msra.mxu0 0
    %609 = vmatprep.subr.bf16.mxu0 0
    %610 = vmatpush1.bf16.xpose.msra.mxu0 0
    %611 = vmatprep.subr.bf16.mxu0 0
    %612 = vmatpush1.bf16.xpose.msra.mxu0 0
    %613 = vmatprep.subr.bf16.mxu0 0
    %614 = vmatpush1.bf16.xpose.msra.mxu0 0
    %615 = vmatprep.subr.bf16.mxu0 0
    %616 = vmatpush1.bf16.xpose.msra.mxu0 0
    %617 = vmatprep.subr.bf16.mxu0 0
    %618 = vmatpush1.bf16.xpose.msra.mxu0 0
    %619 = vmatprep.subr.bf16.mxu0 0
    %620 = vmatpush1.bf16.xpose.msra.mxu0 0
    %621 = vmatprep.mubr.bf16.mxu0 0
    %622 = vmatmul.mubr.bf16.gmra.mrb[0].mxu0 %v584
    %v623 = vpop.f32.mrb[0].mxu0
    %v624 = vadd.f32 0.0, %v623
    %v625 = vpop.f32.mrb[0].mxu0
    %v626 = vpop.f32.mrb[0].mxu0
    %v627 = vpop.f32.mrb[0].mxu0
    %628 = vdwg.mxu0
    %629 = vrot.lane.b32.xlu0 %v349, 112
    %v630 = vpop.permute.xlu0 %629
    %631 = vrot.lane.b32.xlu0 %v349, 80
    %v632 = vpop.permute.xlu0 %631
    %v634 = vsel %vm353, %v630, 0
    %v637 = vsel %vm353, %v632, 0
    %639 = vmatprep.subr.bf16.mxu0 0
    %640 = vmatpush1.bf16.xpose.msra.mxu0 %v637
    %641 = vmatprep.subr.bf16.mxu0 0
    %642 = vmatpush1.bf16.xpose.msra.mxu0 0
    %643 = vmatprep.subr.bf16.mxu0 0
    %644 = vmatpush1.bf16.xpose.msra.mxu0 0
    %645 = vmatprep.subr.bf16.mxu0 0
    %646 = vmatpush1.bf16.xpose.msra.mxu0 0
    %647 = vmatprep.subr.bf16.mxu0 0
    %648 = vmatpush1.bf16.xpose.msra.mxu0 0
    %649 = vmatprep.subr.bf16.mxu0 0
    %650 = vmatpush1.bf16.xpose.msra.mxu0 0
    %651 = vmatprep.subr.bf16.mxu0 0
    %652 = vmatpush1.bf16.xpose.msra.mxu0 0
    %653 = vmatprep.subr.bf16.mxu0 0
    %654 = vmatpush1.bf16.xpose.msra.mxu0 0
    %655 = vmatprep.subr.bf16.mxu0 0
    %656 = vmatpush1.bf16.xpose.msra.mxu0 0
    %657 = vmatprep.subr.bf16.mxu0 0
    %658 = vmatpush1.bf16.xpose.msra.mxu0 0
    %659 = vmatprep.subr.bf16.mxu0 0
    %660 = vmatpush1.bf16.xpose.msra.mxu0 0
    %661 = vmatprep.subr.bf16.mxu0 0
    %662 = vmatpush1.bf16.xpose.msra.mxu0 0
    %663 = vmatprep.subr.bf16.mxu0 0
    %664 = vmatpush1.bf16.xpose.msra.mxu0 0
    %665 = vmatprep.subr.bf16.mxu0 0
    %666 = vmatpush1.bf16.xpose.msra.mxu0 0
    %667 = vmatprep.subr.bf16.mxu0 0
    %668 = vmatpush1.bf16.xpose.msra.mxu0 0
    %669 = vmatprep.subr.bf16.mxu0 0
    %670 = vmatpush1.bf16.xpose.msra.mxu0 0
    %671 = vmatprep.mubr.bf16.mxu0 0
    %672 = vmatmul.mubr.bf16.gmra.mrb[0].mxu0 %v634
    %v673 = vpop.f32.mrb[0].mxu0
    %v674 = vadd.f32 0.0, %v673
    %v675 = vpop.f32.mrb[0].mxu0
    %v676 = vpop.f32.mrb[0].mxu0
    %v677 = vpop.f32.mrb[0].mxu0
    %678 = vdwg.mxu0
    %v679 = vmul.f32 %v624, 0.25
    %v680 = vmul.f32 %v674, 0.25
    %v681 = vadd.f32 %v679, %v454
    %v682 = vadd.f32 %v680, %v458
    %v683 = vmul.f32 %v681, 1.442695
    %v684 = vpow.pop %v683
    %v685 = vmul.f32 %v682, 1.442695
    %v686 = vpow.pop %v685
    %v687 = vsel %vm467, %v684, 0.0
    %688 = vadd.xlane.f32.xlu0 %v687
    %v689 = vpop.xlane.xlu0 %688
    %v690 = vsel %vm467, %v686, 0.0
    %691 = vadd.xlane.f32.xlu0 %v690
    %v692 = vpop.xlane.xlu0 %691
    %v693 = vrcp.pop %v689
    %v694 = vrcp.pop %v692
    %v695 = vmul.f32 %v684, %v693
    %v696 = vmul.f32 %v686, %v694
    %v697 = vpack.c.bf16 %v695, %v695
    %v698 = vpack.c.bf16 %v696, %v696
    %699 = vrot.lane.b32.xlu0 %v348, 48
    %v700 = vpop.permute.xlu0 %699
    %v702 = vsel %vm467, %v697, 0
    %v705 = vsel %vm485, %v700, 0
    %707 = vmatprep.subr.bf16.mxu0 0
    %708 = vmatpush1.bf16.msra.mxu0 %v705
    %709 = vmatprep.subr.bf16.mxu0 0
    %710 = vmatpush1.bf16.msra.mxu0 0
    %711 = vmatprep.subr.bf16.mxu0 0
    %712 = vmatpush1.bf16.msra.mxu0 0
    %713 = vmatprep.subr.bf16.mxu0 0
    %714 = vmatpush1.bf16.msra.mxu0 0
    %715 = vmatprep.subr.bf16.mxu0 0
    %716 = vmatpush1.bf16.msra.mxu0 0
    %717 = vmatprep.subr.bf16.mxu0 0
    %718 = vmatpush1.bf16.msra.mxu0 0
    %719 = vmatprep.subr.bf16.mxu0 0
    %720 = vmatpush1.bf16.msra.mxu0 0
    %721 = vmatprep.subr.bf16.mxu0 0
    %722 = vmatpush1.bf16.msra.mxu0 0
    %723 = vmatprep.subr.bf16.mxu0 0
    %724 = vmatpush1.bf16.msra.mxu0 0
    %725 = vmatprep.subr.bf16.mxu0 0
    %726 = vmatpush1.bf16.msra.mxu0 0
    %727 = vmatprep.subr.bf16.mxu0 0
    %728 = vmatpush1.bf16.msra.mxu0 0
    %729 = vmatprep.subr.bf16.mxu0 0
    %730 = vmatpush1.bf16.msra.mxu0 0
    %731 = vmatprep.subr.bf16.mxu0 0
    %732 = vmatpush1.bf16.msra.mxu0 0
    %733 = vmatprep.subr.bf16.mxu0 0
    %734 = vmatpush1.bf16.msra.mxu0 0
    %735 = vmatprep.subr.bf16.mxu0 0
    %736 = vmatpush1.bf16.msra.mxu0 0
    %737 = vmatprep.subr.bf16.mxu0 0
    %738 = vmatpush1.bf16.msra.mxu0 0
    %739 = vmatprep.mubr.bf16.mxu0 0
    %740 = vmatmul.mubr.bf16.gmra.mrb[0].mxu0 %v702
    %v741 = vpop.f32.mrb[0].mxu0
    %v742 = vadd.f32 0.0, %v741
    %v743 = vpop.f32.mrb[0].mxu0
    %v744 = vpop.f32.mrb[0].mxu0
    %v745 = vpop.f32.mrb[0].mxu0
    %746 = vdwg.mxu0
    %747 = vrot.lane.b32.xlu0 %v349, 48
    %v748 = vpop.permute.xlu0 %747
    %v750 = vsel %vm467, %v698, 0
    %v753 = vsel %vm485, %v748, 0
    %755 = vmatprep.subr.bf16.mxu0 0
    %756 = vmatpush1.bf16.msra.mxu0 %v753
    %757 = vmatprep.subr.bf16.mxu0 0
    %758 = vmatpush1.bf16.msra.mxu0 0
    %759 = vmatprep.subr.bf16.mxu0 0
    %760 = vmatpush1.bf16.msra.mxu0 0
    %761 = vmatprep.subr.bf16.mxu0 0
    %762 = vmatpush1.bf16.msra.mxu0 0
    %763 = vmatprep.subr.bf16.mxu0 0
    %764 = vmatpush1.bf16.msra.mxu0 0
    %765 = vmatprep.subr.bf16.mxu0 0
    %766 = vmatpush1.bf16.msra.mxu0 0
    %767 = vmatprep.subr.bf16.mxu0 0
    %768 = vmatpush1.bf16.msra.mxu0 0
    %769 = vmatprep.subr.bf16.mxu0 0
    %770 = vmatpush1.bf16.msra.mxu0 0
    %771 = vmatprep.subr.bf16.mxu0 0
    %772 = vmatpush1.bf16.msra.mxu0 0
    %773 = vmatprep.subr.bf16.mxu0 0
    %774 = vmatpush1.bf16.msra.mxu0 0
    %775 = vmatprep.subr.bf16.mxu0 0
    %776 = vmatpush1.bf16.msra.mxu0 0
    %777 = vmatprep.subr.bf16.mxu0 0
    %778 = vmatpush1.bf16.msra.mxu0 0
    %779 = vmatprep.subr.bf16.mxu0 0
    %780 = vmatpush1.bf16.msra.mxu0 0
    %781 = vmatprep.subr.bf16.mxu0 0
    %782 = vmatpush1.bf16.msra.mxu0 0
    %783 = vmatprep.subr.bf16.mxu0 0
    %784 = vmatpush1.bf16.msra.mxu0 0
    %785 = vmatprep.subr.bf16.mxu0 0
    %786 = vmatpush1.bf16.msra.mxu0 0
    %787 = vmatprep.mubr.bf16.mxu0 0
    %788 = vmatmul.mubr.bf16.gmra.mrb[0].mxu0 %v750
    %v789 = vpop.f32.mrb[0].mxu0
    %v790 = vadd.f32 0.0, %v789
    %v791 = vpop.f32.mrb[0].mxu0
    %v792 = vpop.f32.mrb[0].mxu0
    %v793 = vpop.f32.mrb[0].mxu0
    %794 = vdwg.mxu0
    %797 = vrot.lane.b32.xlu0 %v742, 16
    %v798 = vpop.permute.xlu0 %797
    %799 = vrot.lane.b32.xlu0 %v790, 16
    %v800 = vpop.permute.xlu0 %799
    %vm803 = vcmask 261248
    %804 = vst.msk [vmem:[#allocation2] sm:$0xff] %vm803, %v798
    %805 = vst.msk [vmem:[#allocation2 + $0x8] sm:$0xff] %vm803, %v800
    %v806 = vld [vmem:[#allocation2] sm:$0xff]
    %v807 = vld [vmem:[#allocation2 + $0x8] sm:$0xff]
    %v808 = vpack.c.bf16 %v807, %v806
    %v809 = vld [vmem:[%s3 + $0x5] sm:$0x1]
    %v810 = vlaneseq
    %v811 = vshrl.u32 %v810, 7
    %v812 = vsub.s32 0, %v811
    %v813 = vrot.slane %v809, %v812
    %814 = vrot.lane.b32.xlu0 %v300, 32
    %v815 = vpop.permute.xlu0 %814
    %816 = vrot.lane.b32.xlu0 %v301, 32
    %v817 = vpop.permute.xlu0 %816
    %v821 = vsel %vm203, %v808, 0
    %823 = vmatprep.subr.bf16.mxu0 0
    %824 = vmatpush1.bf16.msra.mxu0 %v815
    %825 = vmatprep.subr.bf16.mxu0 0
    %826 = vmatpush1.bf16.msra.mxu0 %v817
    %827 = vmatprep.subr.bf16.mxu0 0
    %828 = vmatpush1.bf16.msra.mxu0 0
    %829 = vmatprep.subr.bf16.mxu0 0
    %830 = vmatpush1.bf16.msra.mxu0 0
    %831 = vmatprep.subr.bf16.mxu0 0
    %832 = vmatpush1.bf16.msra.mxu0 0
    %833 = vmatprep.subr.bf16.mxu0 0
    %834 = vmatpush1.bf16.msra.mxu0 0
    %835 = vmatprep.subr.bf16.mxu0 0
    %836 = vmatpush1.bf16.msra.mxu0 0
    %837 = vmatprep.subr.bf16.mxu0 0
    %838 = vmatpush1.bf16.msra.mxu0 0
    %839 = vmatprep.subr.bf16.mxu0 0
    %840 = vmatpush1.bf16.msra.mxu0 0
    %841 = vmatprep.subr.bf16.mxu0 0
    %842 = vmatpush1.bf16.msra.mxu0 0
    %843 = vmatprep.subr.bf16.mxu0 0
    %844 = vmatpush1.bf16.msra.mxu0 0
    %845 = vmatprep.subr.bf16.mxu0 0
    %846 = vmatpush1.bf16.msra.mxu0 0
    %847 = vmatprep.subr.bf16.mxu0 0
    %848 = vmatpush1.bf16.msra.mxu0 0
    %849 = vmatprep.subr.bf16.mxu0 0
    %850 = vmatpush1.bf16.msra.mxu0 0
    %851 = vmatprep.subr.bf16.mxu0 0
    %852 = vmatpush1.bf16.msra.mxu0 0
    %853 = vmatprep.subr.bf16.mxu0 0
    %854 = vmatpush1.bf16.msra.mxu0 0
    %855 = vmatprep.mubr.bf16.mxu0 0
    %856 = vmatmul.mubr.bf16.gmra.mrb[0].mxu0 %v821
    %v857 = vpop.f32.mrb[0].mxu0
    %v858 = vadd.f32 %v813, %v857
    %v859 = vpop.f32.mrb[0].mxu0
    %v860 = vpop.f32.mrb[0].mxu0
    %v861 = vadd.f32 %v813, %v860
    %v862 = vpop.f32.mrb[0].mxu0
    %863 = vdwg.mxu0
    %v864 = vadd.f32 %v858, %v241
    %v865 = vadd.f32 %v861, %v242
    %v866 = vld [vmem:[%s3 + $0x6] sm:$0x1]
    %v867 = vld [vmem:[%s3 + $0x7] sm:$0x1]
    %v868 = vsel %vm203, %v864, 0.0
    %869 = vadd.xlane.f32.xlu0 %v868
    %v870 = vpop.xlane.xlu0 %869
    %v871 = vsel %vm203, %v865, 0.0
    %872 = vadd.xlane.f32.xlu0 %v871
    %v873 = vpop.xlane.xlu0 %872
    %v874 = vmul.f32 %v870, %v210
    %v875 = vmul.f32 %v873, %v210
    %v876 = vsub.f32 %v864, %v874
    %v877 = vsub.f32 %v865, %v875
    %v878 = vmul.f32 %v876, %v876
    %v879 = vmul.f32 %v877, %v877
    %v880 = vsel %vm203, %v878, 0.0
    %881 = vadd.xlane.f32.xlu0 %v880
    %v882 = vpop.xlane.xlu0 %881
    %v883 = vsel %vm203, %v879, 0.0
    %884 = vadd.xlane.f32.xlu0 %v883
    %v885 = vpop.xlane.xlu0 %884
    %v886 = vmul.f32 %v882, %v210
    %v887 = vmul.f32 %v885, %v210
    %v888 = vadd.f32 %v886, 1e-12
    %v889 = vadd.f32 %v887, 1e-12
    %v890 = vrsqrt.pop %v888
    %v891 = vrsqrt.pop %v889
    %v892 = vmul.f32 %v876, %v890
    %v893 = vmul.f32 %v877, %v891
    %v894 = vlaneseq
    %v895 = vshrl.u32 %v894, 7
    %v896 = vsub.s32 0, %v895
    %v897 = vrot.slane %v866, %v896
    %v898 = vmul.f32 %v892, %v897
    %v899 = vmul.f32 %v893, %v897
    %v900 = vlaneseq
    %v901 = vshrl.u32 %v900, 7
    %v902 = vsub.s32 0, %v901
    %v903 = vrot.slane %v867, %v902
    %v904 = vadd.f32 %v898, %v903
    %v905 = vadd.f32 %v899, %v903
    %v906 = vpack.c.bf16 %v905, %v904
    %v907 = vld [vmem:[%s3 + $0x8] sm:$0x1]
    %v908 = vlaneseq
    %v909 = vshrl.u32 %v908, 7
    %v910 = vsub.s32 0, %v909
    %v911 = vrot.slane %v907, %v910
    %v916 = vunpack.c.l.b16 %v274
    %v917 = vunpack.c.l.b16 %v275
    %v918 = vunpack.c.l.b16 %v276
    %v919 = vunpack.c.l.b16 %v277
    %v920 = vpack.c.b16 %v917, %v916
    %v921 = vpack.c.b16 %v919, %v918
    %v925 = vsel %vm203, %v906, 0
    %927 = vmatprep.subr.bf16.mxu0 0
    %928 = vmatpush1.bf16.msra.mxu0 %v920
    %929 = vmatprep.subr.bf16.mxu0 0
    %930 = vmatpush1.bf16.msra.mxu0 %v921
    %931 = vmatprep.subr.bf16.mxu0 0
    %932 = vmatpush1.bf16.msra.mxu0 0
    %933 = vmatprep.subr.bf16.mxu0 0
    %934 = vmatpush1.bf16.msra.mxu0 0
    %935 = vmatprep.subr.bf16.mxu0 0
    %936 = vmatpush1.bf16.msra.mxu0 0
    %937 = vmatprep.subr.bf16.mxu0 0
    %938 = vmatpush1.bf16.msra.mxu0 0
    %939 = vmatprep.subr.bf16.mxu0 0
    %940 = vmatpush1.bf16.msra.mxu0 0
    %941 = vmatprep.subr.bf16.mxu0 0
    %942 = vmatpush1.bf16.msra.mxu0 0
    %943 = vmatprep.subr.bf16.mxu0 0
    %944 = vmatpush1.bf16.msra.mxu0 0
    %945 = vmatprep.subr.bf16.mxu0 0
    %946 = vmatpush1.bf16.msra.mxu0 0
    %947 = vmatprep.subr.bf16.mxu0 0
    %948 = vmatpush1.bf16.msra.mxu0 0
    %949 = vmatprep.subr.bf16.mxu0 0
    %950 = vmatpush1.bf16.msra.mxu0 0
    %951 = vmatprep.subr.bf16.mxu0 0
    %952 = vmatpush1.bf16.msra.mxu0 0
    %953 = vmatprep.subr.bf16.mxu0 0
    %954 = vmatpush1.bf16.msra.mxu0 0
    %955 = vmatprep.subr.bf16.mxu0 0
    %956 = vmatpush1.bf16.msra.mxu0 0
    %957 = vmatprep.subr.bf16.mxu0 0
    %958 = vmatpush1.bf16.msra.mxu0 0
    %959 = vmatprep.mubr.bf16.mxu0 0
    %960 = vmatmul.mubr.bf16.gmra.mrb[0].mxu0 %v925
    %v961 = vpop.f32.mrb[0].mxu0
    %v962 = vadd.f32 %v911, %v961
    %v963 = vpop.f32.mrb[0].mxu0
    %v964 = vpop.f32.mrb[0].mxu0
    %v965 = vadd.f32 %v911, %v964
    %v966 = vpop.f32.mrb[0].mxu0
    %967 = vdwg.mxu0
    %v968 = vmul.f32 %v962, 0.5
    %v969 = vmul.f32 %v965, 0.5
    %v970 = vmul.f32 %v962, 0.044715
    %v971 = vmul.f32 %v965, 0.044715
    %v972 = vmul.f32 %v970, %v962
    %v973 = vmul.f32 %v971, %v965
    %v974 = vmul.f32 %v972, %v962
    %v975 = vmul.f32 %v973, %v965
    %v976 = vadd.f32 %v962, %v974
    %v977 = vadd.f32 %v965, %v975
    %v978 = vmul.f32 %v976, 0.7978846
    %v979 = vmul.f32 %v977, 0.7978846
    %v980 = vtanh.pop %v978
    %v981 = vtanh.pop %v979
    %v982 = vadd.f32 %v980, 1.0
    %v983 = vadd.f32 %v981, 1.0
    %v984 = vmul.f32 %v968, %v982
    %v985 = vmul.f32 %v969, %v983
    %v986 = vpack.c.bf16 %v985, %v984
    %v987 = vld [vmem:[%s3 + $0x9] sm:$0x1]
    %v988 = vlaneseq
    %v989 = vshrl.u32 %v988, 7
    %v990 = vsub.s32 0, %v989
    %v991 = vrot.slane %v987, %v990
    %v1000 = vunpack.c.l.b16 %v278
    %v1001 = vunpack.c.l.b16 %v279
    %v1002 = vunpack.c.l.b16 %v280
    %v1003 = vunpack.c.l.b16 %v281
    %v1004 = vunpack.c.l.b16 %v282
    %v1005 = vunpack.c.l.b16 %v283
    %v1006 = vunpack.c.l.b16 %v284
    %v1007 = vunpack.c.l.b16 %v285
    %v1008 = vpack.c.b16 %v1001, %v1000
    %v1009 = vpack.c.b16 %v1003, %v1002
    %v1010 = vpack.c.b16 %v1005, %v1004
    %v1011 = vpack.c.b16 %v1007, %v1006
    %vm1016 = vcmask 523264
    %v1018 = vsel %vm1016, %v986, 0
    %1020 = vmatprep.subr.bf16.mxu0 0
    %1021 = vmatpush1.bf16.msra.mxu0 %v1008
    %1022 = vmatprep.subr.bf16.mxu0 0
    %1023 = vmatpush1.bf16.msra.mxu0 %v1009
    %1024 = vmatprep.subr.bf16.mxu0 0
    %1025 = vmatpush1.bf16.msra.mxu0 %v1010
    %1026 = vmatprep.subr.bf16.mxu0 0
    %1027 = vmatpush1.bf16.msra.mxu0 %v1011
    %1028 = vmatprep.subr.bf16.mxu0 0
    %1029 = vmatpush1.bf16.msra.mxu0 0
    %1030 = vmatprep.subr.bf16.mxu0 0
    %1031 = vmatpush1.bf16.msra.mxu0 0
    %1032 = vmatprep.subr.bf16.mxu0 0
    %1033 = vmatpush1.bf16.msra.mxu0 0
    %1034 = vmatprep.subr.bf16.mxu0 0
    %1035 = vmatpush1.bf16.msra.mxu0 0
    %1036 = vmatprep.subr.bf16.mxu0 0
    %1037 = vmatpush1.bf16.msra.mxu0 0
    %1038 = vmatprep.subr.bf16.mxu0 0
    %1039 = vmatpush1.bf16.msra.mxu0 0
    %1040 = vmatprep.subr.bf16.mxu0 0
    %1041 = vmatpush1.bf16.msra.mxu0 0
    %1042 = vmatprep.subr.bf16.mxu0 0
    %1043 = vmatpush1.bf16.msra.mxu0 0
    %1044 = vmatprep.subr.bf16.mxu0 0
    %1045 = vmatpush1.bf16.msra.mxu0 0
    %1046 = vmatprep.subr.bf16.mxu0 0
    %1047 = vmatpush1.bf16.msra.mxu0 0
    %1048 = vmatprep.subr.bf16.mxu0 0
    %1049 = vmatpush1.bf16.msra.mxu0 0
    %1050 = vmatprep.subr.bf16.mxu0 0
    %1051 = vmatpush1.bf16.msra.mxu0 0
    %1052 = vmatprep.mubr.bf16.mxu0 0
    %1053 = vmatmul.mubr.bf16.gmra.mrb[0].mxu0 %v1018
    %v1054 = vpop.f32.mrb[0].mxu0
    %v1055 = vadd.f32 %v991, %v1054
    %v1056 = vpop.f32.mrb[0].mxu0
    %v1057 = vpop.f32.mrb[0].mxu0
    %v1058 = vadd.f32 %v991, %v1057
    %v1059 = vpop.f32.mrb[0].mxu0
    %1060 = vdwg.mxu0
    %v1061 = vadd.f32 %v1055, %v904
    %v1062 = vadd.f32 %v1058, %v905
    %v1063 = vld [vmem:[%s3 + $0xa] sm:$0x1]
    %v1064 = vld [vmem:[%s3 + $0xb] sm:$0x1]
    %v1065 = vsel %vm203, %v1061, 0.0
    %1066 = vadd.xlane.f32.xlu0 %v1065
    %v1067 = vpop.xlane.xlu0 %1066
    %v1068 = vsel %vm203, %v1062, 0.0
    %1069 = vadd.xlane.f32.xlu0 %v1068
    %v1070 = vpop.xlane.xlu0 %1069
    %v1071 = vmul.f32 %v1067, %v210
    %v1072 = vmul.f32 %v1070, %v210
    %v1073 = vsub.f32 %v1061, %v1071
    %v1074 = vsub.f32 %v1062, %v1072
    %v1075 = vmul.f32 %v1073, %v1073
    %v1076 = vmul.f32 %v1074, %v1074
    %v1077 = vsel %vm203, %v1075, 0.0
    %1078 = vadd.xlane.f32.xlu0 %v1077
    %v1079 = vpop.xlane.xlu0 %1078
    %v1080 = vsel %vm203, %v1076, 0.0
    %1081 = vadd.xlane.f32.xlu0 %v1080
    %v1082 = vpop.xlane.xlu0 %1081
    %v1083 = vmul.f32 %v1079, %v210
    %v1084 = vmul.f32 %v1082, %v210
    %v1085 = vadd.f32 %v1083, 1e-12
    %v1086 = vadd.f32 %v1084, 1e-12
    %v1087 = vrsqrt.pop %v1085
    %v1088 = vrsqrt.pop %v1086
    %v1089 = vmul.f32 %v1073, %v1087
    %v1090 = vmul.f32 %v1074, %v1088
    %v1091 = vlaneseq
    %v1092 = vshrl.u32 %v1091, 7
    %v1093 = vsub.s32 0, %v1092
    %v1094 = vrot.slane %v1063, %v1093
    %v1095 = vmul.f32 %v1089, %v1094
    %v1096 = vmul.f32 %v1090, %v1094
    %v1097 = vlaneseq
    %v1098 = vshrl.u32 %v1097, 7
    %v1099 = vsub.s32 0, %v1098
    %v1100 = vrot.slane %v1064, %v1099
    %v1101 = vadd.f32 %v1095, %v1100
    %v1102 = vadd.f32 %v1096, %v1100
    %s1103 = scalar_lea.vmem [#allocation3], 96
    %v1104 = vld [vmem:[%s1103] sm:$0xf]
    %v1105 = vld [vmem:[%s1103 + $0x8] sm:$0xf]
    %v1106 = vld [vmem:[%s1103 + $0x10] sm:$0xf]
    %v1107 = vld [vmem:[%s1103 + $0x18] sm:$0xf]
    %v1108 = vld [vmem:[%s1103 + $0x4] sm:$0xf]
    %v1109 = vld [vmem:[%s1103 + $0xc] sm:$0xf]
    %v1110 = vld [vmem:[%s1103 + $0x14] sm:$0xf]
    %v1111 = vld [vmem:[%s1103 + $0x1c] sm:$0xf]
    %v1112 = vld [vmem:[%s1103 + $0x20] sm:$0xf]
    %v1113 = vld [vmem:[%s1103 + $0x28] sm:$0xf]
    %v1114 = vld [vmem:[%s1103 + $0x30] sm:$0xf]
    %v1115 = vld [vmem:[%s1103 + $0x38] sm:$0xf]
    %v1116 = vld [vmem:[%s1103 + $0x40] sm:$0xf]
    %v1117 = vld [vmem:[%s1103 + $0x48] sm:$0xf]
    %v1118 = vld [vmem:[%s1103 + $0x50] sm:$0xf]
    %v1119 = vld [vmem:[%s1103 + $0x58] sm:$0xf]
    %v1120 = vpack.c.bf16 %v1102, %v1101
    %v1121 = vld [vmem:[%s3 + $0xc] sm:$0x1]
    %v1122 = vlaneseq
    %v1123 = vshrl.u32 %v1122, 7
    %v1124 = vsub.s32 0, %v1123
    %v1125 = vrot.slane %v1121, %v1124
    %v1130 = vunpack.c.l.b16 %v1104
    %v1131 = vunpack.c.l.b16 %v1105
    %v1132 = vunpack.c.l.b16 %v1106
    %v1133 = vunpack.c.l.b16 %v1107
    %v1134 = vpack.c.b16 %v1131, %v1130
    %v1135 = vpack.c.b16 %v1133, %v1132
    %v1139 = vsel %vm203, %v1120, 0
    %1141 = vmatprep.subr.bf16.mxu0 0
    %1142 = vmatpush1.bf16.msra.mxu0 %v1134
    %1143 = vmatprep.subr.bf16.mxu0 0
    %1144 = vmatpush1.bf16.msra.mxu0 %v1135
    %1145 = vmatprep.subr.bf16.mxu0 0
    %1146 = vmatpush1.bf16.msra.mxu0 0
    %1147 = vmatprep.subr.bf16.mxu0 0
    %1148 = vmatpush1.bf16.msra.mxu0 0
    %1149 = vmatprep.subr.bf16.mxu0 0
    %1150 = vmatpush1.bf16.msra.mxu0 0
    %1151 = vmatprep.subr.bf16.mxu0 0
    %1152 = vmatpush1.bf16.msra.mxu0 0
    %1153 = vmatprep.subr.bf16.mxu0 0
    %1154 = vmatpush1.bf16.msra.mxu0 0
    %1155 = vmatprep.subr.bf16.mxu0 0
    %1156 = vmatpush1.bf16.msra.mxu0 0
    %1157 = vmatprep.subr.bf16.mxu0 0
    %1158 = vmatpush1.bf16.msra.mxu0 0
    %1159 = vmatprep.subr.bf16.mxu0 0
    %1160 = vmatpush1.bf16.msra.mxu0 0
    %1161 = vmatprep.subr.bf16.mxu0 0
    %1162 = vmatpush1.bf16.msra.mxu0 0
    %1163 = vmatprep.subr.bf16.mxu0 0
    %1164 = vmatpush1.bf16.msra.mxu0 0
    %1165 = vmatprep.subr.bf16.mxu0 0
    %1166 = vmatpush1.bf16.msra.mxu0 0
    %1167 = vmatprep.subr.bf16.mxu0 0
    %1168 = vmatpush1.bf16.msra.mxu0 0
    %1169 = vmatprep.subr.bf16.mxu0 0
    %1170 = vmatpush1.bf16.msra.mxu0 0
    %1171 = vmatprep.subr.bf16.mxu0 0
    %1172 = vmatpush1.bf16.msra.mxu0 0
    %1173 = vmatprep.mubr.bf16.mxu0 0
    %1174 = vmatmul.mubr.bf16.gmra.mrb[0].mxu0 %v1139
    %v1175 = vpop.f32.mrb[0].mxu0
    %v1176 = vadd.f32 %v1125, %v1175
    %v1177 = vpop.f32.mrb[0].mxu0
    %v1178 = vpop.f32.mrb[0].mxu0
    %v1179 = vadd.f32 %v1125, %v1178
    %v1180 = vpop.f32.mrb[0].mxu0
    %1181 = vdwg.mxu0
    %v1182 = vpack.c.bf16 %v1176, %v1176
    %v1183 = vpack.c.bf16 %v1179, %v1179
    %1185 = vrot.lane.b32.xlu0 %v1182, 96
    %v1186 = vpop.permute.xlu0 %1185
    %v1188 = vsel %vm353, %v1182, 0
    %v1191 = vsel %vm353, %v1186, 0
    %1193 = vmatprep.subr.bf16.mxu0 0
    %1194 = vmatpush1.bf16.xpose.msra.mxu0 %v1191
    %1195 = vmatprep.subr.bf16.mxu0 0
    %1196 = vmatpush1.bf16.xpose.msra.mxu0 0
    %1197 = vmatprep.subr.bf16.mxu0 0
    %1198 = vmatpush1.bf16.xpose.msra.mxu0 0
    %1199 = vmatprep.subr.bf16.mxu0 0
    %1200 = vmatpush1.bf16.xpose.msra.mxu0 0
    %1201 = vmatprep.subr.bf16.mxu0 0
    %1202 = vmatpush1.bf16.xpose.msra.mxu0 0
    %1203 = vmatprep.subr.bf16.mxu0 0
    %1204 = vmatpush1.bf16.xpose.msra.mxu0 0
    %1205 = vmatprep.subr.bf16.mxu0 0
    %1206 = vmatpush1.bf16.xpose.msra.mxu0 0
    %1207 = vmatprep.subr.bf16.mxu0 0
    %1208 = vmatpush1.bf16.xpose.msra.mxu0 0
    %1209 = vmatprep.subr.bf16.mxu0 0
    %1210 = vmatpush1.bf16.xpose.msra.mxu0 0
    %1211 = vmatprep.subr.bf16.mxu0 0
    %1212 = vmatpush1.bf16.xpose.msra.mxu0 0
    %1213 = vmatprep.subr.bf16.mxu0 0
    %1214 = vmatpush1.bf16.xpose.msra.mxu0 0
    %1215 = vmatprep.subr.bf16.mxu0 0
    %1216 = vmatpush1.bf16.xpose.msra.mxu0 0
    %1217 = vmatprep.subr.bf16.mxu0 0
    %1218 = vmatpush1.bf16.xpose.msra.mxu0 0
    %1219 = vmatprep.subr.bf16.mxu0 0
    %1220 = vmatpush1.bf16.xpose.msra.mxu0 0
    %1221 = vmatprep.subr.bf16.mxu0 0
    %1222 = vmatpush1.bf16.xpose.msra.mxu0 0
    %1223 = vmatprep.subr.bf16.mxu0 0
    %1224 = vmatpush1.bf16.xpose.msra.mxu0 0
    %1225 = vmatprep.mubr.bf16.mxu0 0
    %1226 = vmatmul.mubr.bf16.gmra.mrb[0].mxu0 %v1188
    %v1227 = vpop.f32.mrb[0].mxu0
    %v1228 = vadd.f32 0.0, %v1227
    %v1229 = vpop.f32.mrb[0].mxu0
    %v1230 = vpop.f32.mrb[0].mxu0
    %v1231 = vpop.f32.mrb[0].mxu0
    %1232 = vdwg.mxu0
    %1234 = vrot.lane.b32.xlu0 %v1183, 96
    %v1235 = vpop.permute.xlu0 %1234
    %v1237 = vsel %vm353, %v1183, 0
    %v1240 = vsel %vm353, %v1235, 0
    %1242 = vmatprep.subr.bf16.mxu0 0
    %1243 = vmatpush1.bf16.xpose.msra.mxu0 %v1240
    %1244 = vmatprep.subr.bf16.mxu0 0
    %1245 = vmatpush1.bf16.xpose.msra.mxu0 0
    %1246 = vmatprep.subr.bf16.mxu0 0
    %1247 = vmatpush1.bf16.xpose.msra.mxu0 0
    %1248 = vmatprep.subr.bf16.mxu0 0
    %1249 = vmatpush1.bf16.xpose.msra.mxu0 0
    %1250 = vmatprep.subr.bf16.mxu0 0
    %1251 = vmatpush1.bf16.xpose.msra.mxu0 0
    %1252 = vmatprep.subr.bf16.mxu0 0
    %1253 = vmatpush1.bf16.xpose.msra.mxu0 0
    %1254 = vmatprep.subr.bf16.mxu0 0
    %1255 = vmatpush1.bf16.xpose.msra.mxu0 0
    %1256 = vmatprep.subr.bf16.mxu0 0
    %1257 = vmatpush1.bf16.xpose.msra.mxu0 0
    %1258 = vmatprep.subr.bf16.mxu0 0
    %1259 = vmatpush1.bf16.xpose.msra.mxu0 0
    %1260 = vmatprep.subr.bf16.mxu0 0
    %1261 = vmatpush1.bf16.xpose.msra.mxu0 0
    %1262 = vmatprep.subr.bf16.mxu0 0
    %1263 = vmatpush1.bf16.xpose.msra.mxu0 0
    %1264 = vmatprep.subr.bf16.mxu0 0
    %1265 = vmatpush1.bf16.xpose.msra.mxu0 0
    %1266 = vmatprep.subr.bf16.mxu0 0
    %1267 = vmatpush1.bf16.xpose.msra.mxu0 0
    %1268 = vmatprep.subr.bf16.mxu0 0
    %1269 = vmatpush1.bf16.xpose.msra.mxu0 0
    %1270 = vmatprep.subr.bf16.mxu0 0
    %1271 = vmatpush1.bf16.xpose.msra.mxu0 0
    %1272 = vmatprep.subr.bf16.mxu0 0
    %1273 = vmatpush1.bf16.xpose.msra.mxu0 0
    %1274 = vmatprep.mubr.bf16.mxu0 0
    %1275 = vmatmul.mubr.bf16.gmra.mrb[0].mxu0 %v1237
    %v1276 = vpop.f32.mrb[0].mxu0
    %v1277 = vadd.f32 0.0, %v1276
    %v1278 = vpop.f32.mrb[0].mxu0
    %v1279 = vpop.f32.mrb[0].mxu0
    %v1280 = vpop.f32.mrb[0].mxu0
    %1281 = vdwg.mxu0
    %v1282 = vmul.f32 %v1228, 0.25
    %v1283 = vmul.f32 %v1277, 0.25
    %v1284 = vadd.f32 %v1282, %v454
    %v1285 = vadd.f32 %v1283, %v458
    %v1286 = vmul.f32 %v1284, 1.442695
    %v1287 = vpow.pop %v1286
    %v1288 = vmul.f32 %v1285, 1.442695
    %v1289 = vpow.pop %v1288
    %v1290 = vsel %vm467, %v1287, 0.0
    %1291 = vadd.xlane.f32.xlu0 %v1290
    %v1292 = vpop.xlane.xlu0 %1291
    %v1293 = vsel %vm467, %v1289, 0.0
    %1294 = vadd.xlane.f32.xlu0 %v1293
    %v1295 = vpop.xlane.xlu0 %1294
    %v1296 = vrcp.pop %v1292
    %v1297 = vrcp.pop %v1295
    %v1298 = vmul.f32 %v1287, %v1296
    %v1299 = vmul.f32 %v1289, %v1297
    %v1300 = vpack.c.bf16 %v1298, %v1298
    %v1301 = vpack.c.bf16 %v1299, %v1299
    %1302 = vrot.lane.b32.xlu0 %v1182, 64
    %v1303 = vpop.permute.xlu0 %1302
    %v1305 = vsel %vm467, %v1300, 0
    %v1308 = vsel %vm485, %v1303, 0
    %1310 = vmatprep.subr.bf16.mxu0 0
    %1311 = vmatpush1.bf16.msra.mxu0 %v1308
    %1312 = vmatprep.subr.bf16.mxu0 0
    %1313 = vmatpush1.bf16.msra.mxu0 0
    %1314 = vmatprep.subr.bf16.mxu0 0
    %1315 = vmatpush1.bf16.msra.mxu0 0
    %1316 = vmatprep.subr.bf16.mxu0 0
    %1317 = vmatpush1.bf16.msra.mxu0 0
    %1318 = vmatprep.subr.bf16.mxu0 0
    %1319 = vmatpush1.bf16.msra.mxu0 0
    %1320 = vmatprep.subr.bf16.mxu0 0
    %1321 = vmatpush1.bf16.msra.mxu0 0
    %1322 = vmatprep.subr.bf16.mxu0 0
    %1323 = vmatpush1.bf16.msra.mxu0 0
    %1324 = vmatprep.subr.bf16.mxu0 0
    %1325 = vmatpush1.bf16.msra.mxu0 0
    %1326 = vmatprep.subr.bf16.mxu0 0
    %1327 = vmatpush1.bf16.msra.mxu0 0
    %1328 = vmatprep.subr.bf16.mxu0 0
    %1329 = vmatpush1.bf16.msra.mxu0 0
    %1330 = vmatprep.subr.bf16.mxu0 0
    %1331 = vmatpush1.bf16.msra.mxu0 0
    %1332 = vmatprep.subr.bf16.mxu0 0
    %1333 = vmatpush1.bf16.msra.mxu0 0
    %1334 = vmatprep.subr.bf16.mxu0 0
    %1335 = vmatpush1.bf16.msra.mxu0 0
    %1336 = vmatprep.subr.bf16.mxu0 0
    %1337 = vmatpush1.bf16.msra.mxu0 0
    %1338 = vmatprep.subr.bf16.mxu0 0
    %1339 = vmatpush1.bf16.msra.mxu0 0
    %1340 = vmatprep.subr.bf16.mxu0 0
    %1341 = vmatpush1.bf16.msra.mxu0 0
    %1342 = vmatprep.mubr.bf16.mxu0 0
    %1343 = vmatmul.mubr.bf16.gmra.mrb[0].mxu0 %v1305
    %v1344 = vpop.f32.mrb[0].mxu0
    %v1345 = vadd.f32 0.0, %v1344
    %v1346 = vpop.f32.mrb[0].mxu0
    %v1347 = vpop.f32.mrb[0].mxu0
    %v1348 = vpop.f32.mrb[0].mxu0
    %1349 = vdwg.mxu0
    %1350 = vrot.lane.b32.xlu0 %v1183, 64
    %v1351 = vpop.permute.xlu0 %1350
    %v1353 = vsel %vm467, %v1301, 0
    %v1356 = vsel %vm485, %v1351, 0
    %1358 = vmatprep.subr.bf16.mxu0 0
    %1359 = vmatpush1.bf16.msra.mxu0 %v1356
    %1360 = vmatprep.subr.bf16.mxu0 0
    %1361 = vmatpush1.bf16.msra.mxu0 0
    %1362 = vmatprep.subr.bf16.mxu0 0
    %1363 = vmatpush1.bf16.msra.mxu0 0
    %1364 = vmatprep.subr.bf16.mxu0 0
    %1365 = vmatpush1.bf16.msra.mxu0 0
    %1366 = vmatprep.subr.bf16.mxu0 0
    %1367 = vmatpush1.bf16.msra.mxu0 0
    %1368 = vmatprep.subr.bf16.mxu0 0
    %1369 = vmatpush1.bf16.msra.mxu0 0
    %1370 = vmatprep.subr.bf16.mxu0 0
    %1371 = vmatpush1.bf16.msra.mxu0 0
    %1372 = vmatprep.subr.bf16.mxu0 0
    %1373 = vmatpush1.bf16.msra.mxu0 0
    %1374 = vmatprep.subr.bf16.mxu0 0
    %1375 = vmatpush1.bf16.msra.mxu0 0
    %1376 = vmatprep.subr.bf16.mxu0 0
    %1377 = vmatpush1.bf16.msra.mxu0 0
    %1378 = vmatprep.subr.bf16.mxu0 0
    %1379 = vmatpush1.bf16.msra.mxu0 0
    %1380 = vmatprep.subr.bf16.mxu0 0
    %1381 = vmatpush1.bf16.msra.mxu0 0
    %1382 = vmatprep.subr.bf16.mxu0 0
    %1383 = vmatpush1.bf16.msra.mxu0 0
    %1384 = vmatprep.subr.bf16.mxu0 0
    %1385 = vmatpush1.bf16.msra.mxu0 0
    %1386 = vmatprep.subr.bf16.mxu0 0
    %1387 = vmatpush1.bf16.msra.mxu0 0
    %1388 = vmatprep.subr.bf16.mxu0 0
    %1389 = vmatpush1.bf16.msra.mxu0 0
    %1390 = vmatprep.mubr.bf16.mxu0 0
    %1391 = vmatmul.mubr.bf16.gmra.mrb[0].mxu0 %v1353
    %v1392 = vpop.f32.mrb[0].mxu0
    %v1393 = vadd.f32 0.0, %v1392
    %v1394 = vpop.f32.mrb[0].mxu0
    %v1395 = vpop.f32.mrb[0].mxu0
    %v1396 = vpop.f32.mrb[0].mxu0
    %1397 = vdwg.mxu0
    %1398 = vst.msk [vmem:[#allocation2] sm:$0xff] %vm353, %v1345
    %1399 = vst.msk [vmem:[#allocation2 + $0x8] sm:$0xff] %vm353, %v1393
    %1400 = vrot.lane.b32.xlu0 %v1182, 112
    %v1401 = vpop.permute.xlu0 %1400
    %1402 = vrot.lane.b32.xlu0 %v1182, 80
    %v1403 = vpop.permute.xlu0 %1402
    %v1405 = vsel %vm353, %v1401, 0
    %v1408 = vsel %vm353, %v1403, 0
    %1410 = vmatprep.subr.bf16.mxu0 0
    %1411 = vmatpush1.bf16.xpose.msra.mxu0 %v1408
    %1412 = vmatprep.subr.bf16.mxu0 0
    %1413 = vmatpush1.bf16.xpose.msra.mxu0 0
    %1414 = vmatprep.subr.bf16.mxu0 0
    %1415 = vmatpush1.bf16.xpose.msra.mxu0 0
    %1416 = vmatprep.subr.bf16.mxu0 0
    %1417 = vmatpush1.bf16.xpose.msra.mxu0 0
    %1418 = vmatprep.subr.bf16.mxu0 0
    %1419 = vmatpush1.bf16.xpose.msra.mxu0 0
    %1420 = vmatprep.subr.bf16.mxu0 0
    %1421 = vmatpush1.bf16.xpose.msra.mxu0 0
    %1422 = vmatprep.subr.bf16.mxu0 0
    %1423 = vmatpush1.bf16.xpose.msra.mxu0 0
    %1424 = vmatprep.subr.bf16.mxu0 0
    %1425 = vmatpush1.bf16.xpose.msra.mxu0 0
    %1426 = vmatprep.subr.bf16.mxu0 0
    %1427 = vmatpush1.bf16.xpose.msra.mxu0 0
    %1428 = vmatprep.subr.bf16.mxu0 0
    %1429 = vmatpush1.bf16.xpose.msra.mxu0 0
    %1430 = vmatprep.subr.bf16.mxu0 0
    %1431 = vmatpush1.bf16.xpose.msra.mxu0 0
    %1432 = vmatprep.subr.bf16.mxu0 0
    %1433 = vmatpush1.bf16.xpose.msra.mxu0 0
    %1434 = vmatprep.subr.bf16.mxu0 0
    %1435 = vmatpush1.bf16.xpose.msra.mxu0 0
    %1436 = vmatprep.subr.bf16.mxu0 0
    %1437 = vmatpush1.bf16.xpose.msra.mxu0 0
    %1438 = vmatprep.subr.bf16.mxu0 0
    %1439 = vmatpush1.bf16.xpose.msra.mxu0 0
    %1440 = vmatprep.subr.bf16.mxu0 0
    %1441 = vmatpush1.bf16.xpose.msra.mxu0 0
    %1442 = vmatprep.mubr.bf16.mxu0 0
    %1443 = vmatmul.mubr.bf16.gmra.mrb[0].mxu0 %v1405
    %v1444 = vpop.f32.mrb[0].mxu0
    %v1445 = vadd.f32 0.0, %v1444
    %v1446 = vpop.f32.mrb[0].mxu0
    %v1447 = vpop.f32.mrb[0].mxu0
    %v1448 = vpop.f32.mrb[0].mxu0
    %1449 = vdwg.mxu0
    %1450 = vrot.lane.b32.xlu0 %v1183, 112
    %v1451 = vpop.permute.xlu0 %1450
    %1452 = vrot.lane.b32.xlu0 %v1183, 80
    %v1453 = vpop.permute.xlu0 %1452
    %v1455 = vsel %vm353, %v1451, 0
    %v1458 = vsel %vm353, %v1453, 0
    %1460 = vmatprep.subr.bf16.mxu0 0
    %1461 = vmatpush1.bf16.xpose.msra.mxu0 %v1458
    %1462 = vmatprep.subr.bf16.mxu0 0
    %1463 = vmatpush1.bf16.xpose.msra.mxu0 0
    %1464 = vmatprep.subr.bf16.mxu0 0
    %1465 = vmatpush1.bf16.xpose.msra.mxu0 0
    %1466 = vmatprep.subr.bf16.mxu0 0
    %1467 = vmatpush1.bf16.xpose.msra.mxu0 0
    %1468 = vmatprep.subr.bf16.mxu0 0
    %1469 = vmatpush1.bf16.xpose.msra.mxu0 0
    %1470 = vmatprep.subr.bf16.mxu0 0
    %1471 = vmatpush1.bf16.xpose.msra.mxu0 0
    %1472 = vmatprep.subr.bf16.mxu0 0
    %1473 = vmatpush1.bf16.xpose.msra.mxu0 0
    %1474 = vmatprep.subr.bf16.mxu0 0
    %1475 = vmatpush1.bf16.xpose.msra.mxu0 0
    %1476 = vmatprep.subr.bf16.mxu0 0
    %1477 = vmatpush1.bf16.xpose.msra.mxu0 0
    %1478 = vmatprep.subr.bf16.mxu0 0
    %1479 = vmatpush1.bf16.xpose.msra.mxu0 0
    %1480 = vmatprep.subr.bf16.mxu0 0
    %1481 = vmatpush1.bf16.xpose.msra.mxu0 0
    %1482 = vmatprep.subr.bf16.mxu0 0
    %1483 = vmatpush1.bf16.xpose.msra.mxu0 0
    %1484 = vmatprep.subr.bf16.mxu0 0
    %1485 = vmatpush1.bf16.xpose.msra.mxu0 0
    %1486 = vmatprep.subr.bf16.mxu0 0
    %1487 = vmatpush1.bf16.xpose.msra.mxu0 0
    %1488 = vmatprep.subr.bf16.mxu0 0
    %1489 = vmatpush1.bf16.xpose.msra.mxu0 0
    %1490 = vmatprep.subr.bf16.mxu0 0
    %1491 = vmatpush1.bf16.xpose.msra.mxu0 0
    %1492 = vmatprep.mubr.bf16.mxu0 0
    %1493 = vmatmul.mubr.bf16.gmra.mrb[0].mxu0 %v1455
    %v1494 = vpop.f32.mrb[0].mxu0
    %v1495 = vadd.f32 0.0, %v1494
    %v1496 = vpop.f32.mrb[0].mxu0
    %v1497 = vpop.f32.mrb[0].mxu0
    %v1498 = vpop.f32.mrb[0].mxu0
    %1499 = vdwg.mxu0
    %v1500 = vmul.f32 %v1445, 0.25
    %v1501 = vmul.f32 %v1495, 0.25
    %v1502 = vadd.f32 %v1500, %v454
    %v1503 = vadd.f32 %v1501, %v458
    %v1504 = vmul.f32 %v1502, 1.442695
    %v1505 = vpow.pop %v1504
    %v1506 = vmul.f32 %v1503, 1.442695
    %v1507 = vpow.pop %v1506
    %v1508 = vsel %vm467, %v1505, 0.0
    %1509 = vadd.xlane.f32.xlu0 %v1508
    %v1510 = vpop.xlane.xlu0 %1509
    %v1511 = vsel %vm467, %v1507, 0.0
    %1512 = vadd.xlane.f32.xlu0 %v1511
    %v1513 = vpop.xlane.xlu0 %1512
    %v1514 = vrcp.pop %v1510
    %v1515 = vrcp.pop %v1513
    %v1516 = vmul.f32 %v1505, %v1514
    %v1517 = vmul.f32 %v1507, %v1515
    %v1518 = vpack.c.bf16 %v1516, %v1516
    %v1519 = vpack.c.bf16 %v1517, %v1517
    %1520 = vrot.lane.b32.xlu0 %v1182, 48
    %v1521 = vpop.permute.xlu0 %1520
    %v1523 = vsel %vm467, %v1518, 0
    %v1526 = vsel %vm485, %v1521, 0
    %1528 = vmatprep.subr.bf16.mxu0 0
    %1529 = vmatpush1.bf16.msra.mxu0 %v1526
    %1530 = vmatprep.subr.bf16.mxu0 0
    %1531 = vmatpush1.bf16.msra.mxu0 0
    %1532 = vmatprep.subr.bf16.mxu0 0
    %1533 = vmatpush1.bf16.msra.mxu0 0
    %1534 = vmatprep.subr.bf16.mxu0 0
    %1535 = vmatpush1.bf16.msra.mxu0 0
    %1536 = vmatprep.subr.bf16.mxu0 0
    %1537 = vmatpush1.bf16.msra.mxu0 0
    %1538 = vmatprep.subr.bf16.mxu0 0
    %1539 = vmatpush1.bf16.msra.mxu0 0
    %1540 = vmatprep.subr.bf16.mxu0 0
    %1541 = vmatpush1.bf16.msra.mxu0 0
    %1542 = vmatprep.subr.bf16.mxu0 0
    %1543 = vmatpush1.bf16.msra.mxu0 0
    %1544 = vmatprep.subr.bf16.mxu0 0
    %1545 = vmatpush1.bf16.msra.mxu0 0
    %1546 = vmatprep.subr.bf16.mxu0 0
    %1547 = vmatpush1.bf16.msra.mxu0 0
    %1548 = vmatprep.subr.bf16.mxu0 0
    %1549 = vmatpush1.bf16.msra.mxu0 0
    %1550 = vmatprep.subr.bf16.mxu0 0
    %1551 = vmatpush1.bf16.msra.mxu0 0
    %1552 = vmatprep.subr.bf16.mxu0 0
    %1553 = vmatpush1.bf16.msra.mxu0 0
    %1554 = vmatprep.subr.bf16.mxu0 0
    %1555 = vmatpush1.bf16.msra.mxu0 0
    %1556 = vmatprep.subr.bf16.mxu0 0
    %1557 = vmatpush1.bf16.msra.mxu0 0
    %1558 = vmatprep.subr.bf16.mxu0 0
    %1559 = vmatpush1.bf16.msra.mxu0 0
    %1560 = vmatprep.mubr.bf16.mxu0 0
    %1561 = vmatmul.mubr.bf16.gmra.mrb[0].mxu0 %v1523
    %v1562 = vpop.f32.mrb[0].mxu0
    %v1563 = vadd.f32 0.0, %v1562
    %v1564 = vpop.f32.mrb[0].mxu0
    %v1565 = vpop.f32.mrb[0].mxu0
    %v1566 = vpop.f32.mrb[0].mxu0
    %1567 = vdwg.mxu0
    %1568 = vrot.lane.b32.xlu0 %v1183, 48
    %v1569 = vpop.permute.xlu0 %1568
    %v1571 = vsel %vm467, %v1519, 0
    %v1574 = vsel %vm485, %v1569, 0
    %1576 = vmatprep.subr.bf16.mxu0 0
    %1577 = vmatpush1.bf16.msra.mxu0 %v1574
    %1578 = vmatprep.subr.bf16.mxu0 0
    %1579 = vmatpush1.bf16.msra.mxu0 0
    %1580 = vmatprep.subr.bf16.mxu0 0
    %1581 = vmatpush1.bf16.msra.mxu0 0
    %1582 = vmatprep.subr.bf16.mxu0 0
    %1583 = vmatpush1.bf16.msra.mxu0 0
    %1584 = vmatprep.subr.bf16.mxu0 0
    %1585 = vmatpush1.bf16.msra.mxu0 0
    %1586 = vmatprep.subr.bf16.mxu0 0
    %1587 = vmatpush1.bf16.msra.mxu0 0
    %1588 = vmatprep.subr.bf16.mxu0 0
    %1589 = vmatpush1.bf16.msra.mxu0 0
    %1590 = vmatprep.subr.bf16.mxu0 0
    %1591 = vmatpush1.bf16.msra.mxu0 0
    %1592 = vmatprep.subr.bf16.mxu0 0
    %1593 = vmatpush1.bf16.msra.mxu0 0
    %1594 = vmatprep.subr.bf16.mxu0 0
    %1595 = vmatpush1.bf16.msra.mxu0 0
    %1596 = vmatprep.subr.bf16.mxu0 0
    %1597 = vmatpush1.bf16.msra.mxu0 0
    %1598 = vmatprep.subr.bf16.mxu0 0
    %1599 = vmatpush1.bf16.msra.mxu0 0
    %1600 = vmatprep.subr.bf16.mxu0 0
    %1601 = vmatpush1.bf16.msra.mxu0 0
    %1602 = vmatprep.subr.bf16.mxu0 0
    %1603 = vmatpush1.bf16.msra.mxu0 0
    %1604 = vmatprep.subr.bf16.mxu0 0
    %1605 = vmatpush1.bf16.msra.mxu0 0
    %1606 = vmatprep.subr.bf16.mxu0 0
    %1607 = vmatpush1.bf16.msra.mxu0 0
    %1608 = vmatprep.mubr.bf16.mxu0 0
    %1609 = vmatmul.mubr.bf16.gmra.mrb[0].mxu0 %v1571
    %v1610 = vpop.f32.mrb[0].mxu0
    %v1611 = vadd.f32 0.0, %v1610
    %v1612 = vpop.f32.mrb[0].mxu0
    %v1613 = vpop.f32.mrb[0].mxu0
    %v1614 = vpop.f32.mrb[0].mxu0
    %1615 = vdwg.mxu0
    %1618 = vrot.lane.b32.xlu0 %v1563, 16
    %v1619 = vpop.permute.xlu0 %1618
    %1620 = vrot.lane.b32.xlu0 %v1611, 16
    %v1621 = vpop.permute.xlu0 %1620
    %1624 = vst.msk [vmem:[#allocation2] sm:$0xff] %vm803, %v1619
    %1625 = vst.msk [vmem:[#allocation2 + $0x8] sm:$0xff] %vm803, %v1621
    %v1626 = vld [vmem:[#allocation2] sm:$0xff]
    %v1627 = vld [vmem:[#allocation2 + $0x8] sm:$0xff]
    %v1628 = vpack.c.bf16 %v1627, %v1626
    %v1629 = vld [vmem:[%s3 + $0xd] sm:$0x1]
    %v1630 = vlaneseq
    %v1631 = vshrl.u32 %v1630, 7
    %v1632 = vsub.s32 0, %v1631
    %v1633 = vrot.slane %v1629, %v1632
    %1634 = vrot.lane.b32.xlu0 %v1134, 32
    %v1635 = vpop.permute.xlu0 %1634
    %1636 = vrot.lane.b32.xlu0 %v1135, 32
    %v1637 = vpop.permute.xlu0 %1636
    %v1641 = vsel %vm203, %v1628, 0
    %1643 = vmatprep.subr.bf16.mxu0 0
    %1644 = vmatpush1.bf16.msra.mxu0 %v1635
    %1645 = vmatprep.subr.bf16.mxu0 0
    %1646 = vmatpush1.bf16.msra.mxu0 %v1637
    %1647 = vmatprep.subr.bf16.mxu0 0
    %1648 = vmatpush1.bf16.msra.mxu0 0
    %1649 = vmatprep.subr.bf16.mxu0 0
    %1650 = vmatpush1.bf16.msra.mxu0 0
    %1651 = vmatprep.subr.bf16.mxu0 0
    %1652 = vmatpush1.bf16.msra.mxu0 0
    %1653 = vmatprep.subr.bf16.mxu0 0
    %1654 = vmatpush1.bf16.msra.mxu0 0
    %1655 = vmatprep.subr.bf16.mxu0 0
    %1656 = vmatpush1.bf16.msra.mxu0 0
    %1657 = vmatprep.subr.bf16.mxu0 0
    %1658 = vmatpush1.bf16.msra.mxu0 0
    %1659 = vmatprep.subr.bf16.mxu0 0
    %1660 = vmatpush1.bf16.msra.mxu0 0
    %1661 = vmatprep.subr.bf16.mxu0 0
    %1662 = vmatpush1.bf16.msra.mxu0 0
    %1663 = vmatprep.subr.bf16.mxu0 0
    %1664 = vmatpush1.bf16.msra.mxu0 0
    %1665 = vmatprep.subr.bf16.mxu0 0
    %1666 = vmatpush1.bf16.msra.mxu0 0
    %1667 = vmatprep.subr.bf16.mxu0 0
    %1668 = vmatpush1.bf16.msra.mxu0 0
    %1669 = vmatprep.subr.bf16.mxu0 0
    %1670 = vmatpush1.bf16.msra.mxu0 0
    %1671 = vmatprep.subr.bf16.mxu0 0
    %1672 = vmatpush1.bf16.msra.mxu0 0
    %1673 = vmatprep.subr.bf16.mxu0 0
    %1674 = vmatpush1.bf16.msra.mxu0 0
    %1675 = vmatprep.mubr.bf16.mxu0 0
    %1676 = vmatmul.mubr.bf16.gmra.mrb[0].mxu0 %v1641
    %v1677 = vpop.f32.mrb[0].mxu0
    %v1678 = vadd.f32 %v1633, %v1677
    %v1679 = vpop.f32.mrb[0].mxu0
    %v1680 = vpop.f32.mrb[0].mxu0
    %v1681 = vadd.f32 %v1633, %v1680
    %v1682 = vpop.f32.mrb[0].mxu0
    %1683 = vdwg.mxu0
    %v1684 = vadd.f32 %v1678, %v1101
    %v1685 = vadd.f32 %v1681, %v1102
    %v1686 = vld [vmem:[%s3 + $0xe] sm:$0x1]
    %v1687 = vld [vmem:[%s3 + $0xf] sm:$0x1]
    %v1688 = vsel %vm203, %v1684, 0.0
    %1689 = vadd.xlane.f32.xlu0 %v1688
    %v1690 = vpop.xlane.xlu0 %1689
    %v1691 = vsel %vm203, %v1685, 0.0
    %1692 = vadd.xlane.f32.xlu0 %v1691
    %v1693 = vpop.xlane.xlu0 %1692
    %v1694 = vmul.f32 %v1690, %v210
    %v1695 = vmul.f32 %v1693, %v210
    %v1696 = vsub.f32 %v1684, %v1694
    %v1697 = vsub.f32 %v1685, %v1695
    %v1698 = vmul.f32 %v1696, %v1696
    %v1699 = vmul.f32 %v1697, %v1697
    %v1700 = vsel %vm203, %v1698, 0.0
    %1701 = vadd.xlane.f32.xlu0 %v1700
    %v1702 = vpop.xlane.xlu0 %1701
    %v1703 = vsel %vm203, %v1699, 0.0
    %1704 = vadd.xlane.f32.xlu0 %v1703
    %v1705 = vpop.xlane.xlu0 %1704
    %v1706 = vmul.f32 %v1702, %v210
    %v1707 = vmul.f32 %v1705, %v210
    %v1708 = vadd.f32 %v1706, 1e-12
    %v1709 = vadd.f32 %v1707, 1e-12
    %v1710 = vrsqrt.pop %v1708
    %v1711 = vrsqrt.pop %v1709
    %v1712 = vmul.f32 %v1696, %v1710
    %v1713 = vmul.f32 %v1697, %v1711
    %v1714 = vlaneseq
    %v1715 = vshrl.u32 %v1714, 7
    %v1716 = vsub.s32 0, %v1715
    %v1717 = vrot.slane %v1686, %v1716
    %v1718 = vmul.f32 %v1712, %v1717
    %v1719 = vmul.f32 %v1713, %v1717
    %v1720 = vlaneseq
    %v1721 = vshrl.u32 %v1720, 7
    %v1722 = vsub.s32 0, %v1721
    %v1723 = vrot.slane %v1687, %v1722
    %v1724 = vadd.f32 %v1718, %v1723
    %v1725 = vadd.f32 %v1719, %v1723
    %v1726 = vpack.c.bf16 %v1725, %v1724
    %v1727 = vld [vmem:[%s3 + $0x10] sm:$0x1]
    %v1728 = vlaneseq
    %v1729 = vshrl.u32 %v1728, 7
    %v1730 = vsub.s32 0, %v1729
    %v1731 = vrot.slane %v1727, %v1730
    %v1736 = vunpack.c.l.b16 %v1108
    %v1737 = vunpack.c.l.b16 %v1109
    %v1738 = vunpack.c.l.b16 %v1110
    %v1739 = vunpack.c.l.b16 %v1111
    %v1740 = vpack.c.b16 %v1737, %v1736
    %v1741 = vpack.c.b16 %v1739, %v1738
    %v1745 = vsel %vm203, %v1726, 0
    %1747 = vmatprep.subr.bf16.mxu0 0
    %1748 = vmatpush1.bf16.msra.mxu0 %v1740
    %1749 = vmatprep.subr.bf16.mxu0 0
    %1750 = vmatpush1.bf16.msra.mxu0 %v1741
    %1751 = vmatprep.subr.bf16.mxu0 0
    %1752 = vmatpush1.bf16.msra.mxu0 0
    %1753 = vmatprep.subr.bf16.mxu0 0
    %1754 = vmatpush1.bf16.msra.mxu0 0
    %1755 = vmatprep.subr.bf16.mxu0 0
    %1756 = vmatpush1.bf16.msra.mxu0 0
    %1757 = vmatprep.subr.bf16.mxu0 0
    %1758 = vmatpush1.bf16.msra.mxu0 0
    %1759 = vmatprep.subr.bf16.mxu0 0
    %1760 = vmatpush1.bf16.msra.mxu0 0
    %1761 = vmatprep.subr.bf16.mxu0 0
    %1762 = vmatpush1.bf16.msra.mxu0 0
    %1763 = vmatprep.subr.bf16.mxu0 0
    %1764 = vmatpush1.bf16.msra.mxu0 0
    %1765 = vmatprep.subr.bf16.mxu0 0
    %1766 = vmatpush1.bf16.msra.mxu0 0
    %1767 = vmatprep.subr.bf16.mxu0 0
    %1768 = vmatpush1.bf16.msra.mxu0 0
    %1769 = vmatprep.subr.bf16.mxu0 0
    %1770 = vmatpush1.bf16.msra.mxu0 0
    %1771 = vmatprep.subr.bf16.mxu0 0
    %1772 = vmatpush1.bf16.msra.mxu0 0
    %1773 = vmatprep.subr.bf16.mxu0 0
    %1774 = vmatpush1.bf16.msra.mxu0 0
    %1775 = vmatprep.subr.bf16.mxu0 0
    %1776 = vmatpush1.bf16.msra.mxu0 0
    %1777 = vmatprep.subr.bf16.mxu0 0
    %1778 = vmatpush1.bf16.msra.mxu0 0
    %1779 = vmatprep.mubr.bf16.mxu0 0
    %1780 = vmatmul.mubr.bf16.gmra.mrb[0].mxu0 %v1745
    %v1781 = vpop.f32.mrb[0].mxu0
    %v1782 = vadd.f32 %v1731, %v1781
    %v1783 = vpop.f32.mrb[0].mxu0
    %v1784 = vpop.f32.mrb[0].mxu0
    %v1785 = vadd.f32 %v1731, %v1784
    %v1786 = vpop.f32.mrb[0].mxu0
    %1787 = vdwg.mxu0
    %v1788 = vmul.f32 %v1782, 0.5
    %v1789 = vmul.f32 %v1785, 0.5
    %v1790 = vmul.f32 %v1782, 0.044715
    %v1791 = vmul.f32 %v1785, 0.044715
    %v1792 = vmul.f32 %v1790, %v1782
    %v1793 = vmul.f32 %v1791, %v1785
    %v1794 = vmul.f32 %v1792, %v1782
    %v1795 = vmul.f32 %v1793, %v1785
    %v1796 = vadd.f32 %v1782, %v1794
    %v1797 = vadd.f32 %v1785, %v1795
    %v1798 = vmul.f32 %v1796, 0.7978846
    %v1799 = vmul.f32 %v1797, 0.7978846
    %v1800 = vtanh.pop %v1798
    %v1801 = vtanh.pop %v1799
    %v1802 = vadd.f32 %v1800, 1.0
    %v1803 = vadd.f32 %v1801, 1.0
    %v1804 = vmul.f32 %v1788, %v1802
    %v1805 = vmul.f32 %v1789, %v1803
    %v1806 = vpack.c.bf16 %v1805, %v1804
    %v1807 = vld [vmem:[%s3 + $0x11] sm:$0x1]
    %v1808 = vlaneseq
    %v1809 = vshrl.u32 %v1808, 7
    %v1810 = vsub.s32 0, %v1809
    %v1811 = vrot.slane %v1807, %v1810
    %v1820 = vunpack.c.l.b16 %v1112
    %v1821 = vunpack.c.l.b16 %v1113
    %v1822 = vunpack.c.l.b16 %v1114
    %v1823 = vunpack.c.l.b16 %v1115
    %v1824 = vunpack.c.l.b16 %v1116
    %v1825 = vunpack.c.l.b16 %v1117
    %v1826 = vunpack.c.l.b16 %v1118
    %v1827 = vunpack.c.l.b16 %v1119
    %v1828 = vpack.c.b16 %v1821, %v1820
    %v1829 = vpack.c.b16 %v1823, %v1822
    %v1830 = vpack.c.b16 %v1825, %v1824
    %v1831 = vpack.c.b16 %v1827, %v1826
    %v1837 = vsel %vm1016, %v1806, 0
    %1839 = vmatprep.subr.bf16.mxu0 0
    %1840 = vmatpush1.bf16.msra.mxu0 %v1828
    %1841 = vmatprep.subr.bf16.mxu0 0
    %1842 = vmatpush1.bf16.msra.mxu0 %v1829
    %1843 = vmatprep.subr.bf16.mxu0 0
    %1844 = vmatpush1.bf16.msra.mxu0 %v1830
    %1845 = vmatprep.subr.bf16.mxu0 0
    %1846 = vmatpush1.bf16.msra.mxu0 %v1831
    %1847 = vmatprep.subr.bf16.mxu0 0
    %1848 = vmatpush1.bf16.msra.mxu0 0
    %1849 = vmatprep.subr.bf16.mxu0 0
    %1850 = vmatpush1.bf16.msra.mxu0 0
    %1851 = vmatprep.subr.bf16.mxu0 0
    %1852 = vmatpush1.bf16.msra.mxu0 0
    %1853 = vmatprep.subr.bf16.mxu0 0
    %1854 = vmatpush1.bf16.msra.mxu0 0
    %1855 = vmatprep.subr.bf16.mxu0 0
    %1856 = vmatpush1.bf16.msra.mxu0 0
    %1857 = vmatprep.subr.bf16.mxu0 0
    %1858 = vmatpush1.bf16.msra.mxu0 0
    %1859 = vmatprep.subr.bf16.mxu0 0
    %1860 = vmatpush1.bf16.msra.mxu0 0
    %1861 = vmatprep.subr.bf16.mxu0 0
    %1862 = vmatpush1.bf16.msra.mxu0 0
    %1863 = vmatprep.subr.bf16.mxu0 0
    %1864 = vmatpush1.bf16.msra.mxu0 0
    %1865 = vmatprep.subr.bf16.mxu0 0
    %1866 = vmatpush1.bf16.msra.mxu0 0
    %1867 = vmatprep.subr.bf16.mxu0 0
    %1868 = vmatpush1.bf16.msra.mxu0 0
    %1869 = vmatprep.subr.bf16.mxu0 0
    %1870 = vmatpush1.bf16.msra.mxu0 0
    %1871 = vmatprep.mubr.bf16.mxu0 0
    %1872 = vmatmul.mubr.bf16.gmra.mrb[0].mxu0 %v1837
    %v1873 = vpop.f32.mrb[0].mxu0
    %v1874 = vadd.f32 %v1811, %v1873
    %v1875 = vpop.f32.mrb[0].mxu0
    %v1876 = vpop.f32.mrb[0].mxu0
    %v1877 = vadd.f32 %v1811, %v1876
    %v1878 = vpop.f32.mrb[0].mxu0
    %1879 = vdwg.mxu0
    %v1880 = vadd.f32 %v1874, %v1724
    %v1881 = vadd.f32 %v1877, %v1725
    %v1882 = vld [vmem:[%s3 + $0x12] sm:$0x1]
    %v1883 = vld [vmem:[%s3 + $0x13] sm:$0x1]
    %v1884 = vsel %vm203, %v1880, 0.0
    %1885 = vadd.xlane.f32.xlu0 %v1884
    %v1886 = vpop.xlane.xlu0 %1885
    %v1887 = vsel %vm203, %v1881, 0.0
    %1888 = vadd.xlane.f32.xlu0 %v1887
    %v1889 = vpop.xlane.xlu0 %1888
    %v1890 = vmul.f32 %v1886, %v210
    %v1891 = vmul.f32 %v1889, %v210
    %v1892 = vsub.f32 %v1880, %v1890
    %v1893 = vsub.f32 %v1881, %v1891
    %v1894 = vmul.f32 %v1892, %v1892
    %v1895 = vmul.f32 %v1893, %v1893
    %v1896 = vsel %vm203, %v1894, 0.0
    %1897 = vadd.xlane.f32.xlu0 %v1896
    %v1898 = vpop.xlane.xlu0 %1897
    %v1899 = vsel %vm203, %v1895, 0.0
    %1900 = vadd.xlane.f32.xlu0 %v1899
    %v1901 = vpop.xlane.xlu0 %1900
    %v1902 = vmul.f32 %v1898, %v210
    %v1903 = vmul.f32 %v1901, %v210
    %v1904 = vadd.f32 %v1902, 1e-12
    %v1905 = vadd.f32 %v1903, 1e-12
    %v1906 = vrsqrt.pop %v1904
    %v1907 = vrsqrt.pop %v1905
    %v1908 = vmul.f32 %v1892, %v1906
    %v1909 = vmul.f32 %v1893, %v1907
    %v1910 = vlaneseq
    %v1911 = vshrl.u32 %v1910, 7
    %v1912 = vsub.s32 0, %v1911
    %v1913 = vrot.slane %v1882, %v1912
    %v1914 = vmul.f32 %v1908, %v1913
    %v1915 = vmul.f32 %v1909, %v1913
    %v1916 = vlaneseq
    %v1917 = vshrl.u32 %v1916, 7
    %v1918 = vsub.s32 0, %v1917
    %v1919 = vrot.slane %v1883, %v1918
    %v1920 = vadd.f32 %v1914, %v1919
    %v1921 = vadd.f32 %v1915, %v1919
    %v1922 = vlaneseq
    %v1923 = vshrl.u32 %v1922, 7
    %v1924 = vmul.u32 %v1923, 8
    %vm1925 = vcmp.eq.s32.totalorder %v40, %v1924
    %v1926 = vsel %vm1925, 1, 0
    %v1927 = vcvt.s32.f32 %v1926
    %v1928 = vpack.c.bf16 %v1927, %v1927
    %v1929 = vpack.c.bf16 %v1921, %v1920
    %v1931 = vsel %vm353, %v1928, 0
    %1933 = vmatprep.subr.bf16.mxu0 0
    %1934 = vmatpush1.bf16.msra.mxu0 %v1929
    %1935 = vmatprep.subr.bf16.mxu0 0
    %1936 = vmatpush1.bf16.msra.mxu0 0
    %1937 = vmatprep.subr.bf16.mxu0 0
    %1938 = vmatpush1.bf16.msra.mxu0 0
    %1939 = vmatprep.subr.bf16.mxu0 0
    %1940 = vmatpush1.bf16.msra.mxu0 0
    %1941 = vmatprep.subr.bf16.mxu0 0
    %1942 = vmatpush1.bf16.msra.mxu0 0
    %1943 = vmatprep.subr.bf16.mxu0 0
    %1944 = vmatpush1.bf16.msra.mxu0 0
    %1945 = vmatprep.subr.bf16.mxu0 0
    %1946 = vmatpush1.bf16.msra.mxu0 0
    %1947 = vmatprep.subr.bf16.mxu0 0
    %1948 = vmatpush1.bf16.msra.mxu0 0
    %1949 = vmatprep.subr.bf16.mxu0 0
    %1950 = vmatpush1.bf16.msra.mxu0 0
    %1951 = vmatprep.subr.bf16.mxu0 0
    %1952 = vmatpush1.bf16.msra.mxu0 0
    %1953 = vmatprep.subr.bf16.mxu0 0
    %1954 = vmatpush1.bf16.msra.mxu0 0
    %1955 = vmatprep.subr.bf16.mxu0 0
    %1956 = vmatpush1.bf16.msra.mxu0 0
    %1957 = vmatprep.subr.bf16.mxu0 0
    %1958 = vmatpush1.bf16.msra.mxu0 0
    %1959 = vmatprep.subr.bf16.mxu0 0
    %1960 = vmatpush1.bf16.msra.mxu0 0
    %1961 = vmatprep.subr.bf16.mxu0 0
    %1962 = vmatpush1.bf16.msra.mxu0 0
    %1963 = vmatprep.subr.bf16.mxu0 0
    %1964 = vmatpush1.bf16.msra.mxu0 0
    %1965 = vmatprep.mubr.bf16.mxu0 0
    %1966 = vmatmul.mubr.bf16.gmra.mrb[0].mxu0 %v1931
    %v1967 = vpop.f32.mrb[0].mxu0
    %v1968 = vadd.f32 0.0, %v1967
    %v1969 = vpop.f32.mrb[0].mxu0
    %v1970 = vpop.f32.mrb[0].mxu0
    %v1971 = vpop.f32.mrb[0].mxu0
    %1972 = vdwg.mxu0
    %s1973 = scalar_lea.vmem [#allocation3], 192
    %v1974 = vld [vmem:[%s1973] sm:$0xf]
    %v1975 = vld [vmem:[%s1973 + $0x8] sm:$0xf]
    %v1976 = vld [vmem:[%s1973 + $0x10] sm:$0xf]
    %v1977 = vld [vmem:[%s1973 + $0x18] sm:$0xf]
    %v1978 = vld [vmem:[%s1973] sm:$0xff]
    %v1979 = vld [vmem:[%s1973 + $0x8] sm:$0xff]
    %v1980 = vld [vmem:[%s1973 + $0x10] sm:$0xff]
    %v1981 = vld [vmem:[%s1973 + $0x18] sm:$0xff]
    %v1982 = vpack.c.bf16 %v1968, %v1968
    %v1983 = vld [vmem:[%s3 + $0x2] sm:$0x1]
    %v1984 = vlaneseq
    %v1985 = vshrl.u32 %v1984, 7
    %v1986 = vsub.s32 0, %v1985
    %v1987 = vrot.slane %v1983, %v1986
    %v1992 = vunpack.c.l.b16 %v1974
    %v1993 = vunpack.c.l.b16 %v1975
    %v1994 = vunpack.c.l.b16 %v1976
    %v1995 = vunpack.c.l.b16 %v1977
    %v1996 = vpack.c.b16 %v1993, %v1992
    %v1997 = vpack.c.b16 %v1995, %v1994
    %v2001 = vsel %vm203, %v1982, 0
    %2003 = vmatprep.subr.bf16.mxu0 0
    %2004 = vmatpush1.bf16.msra.mxu0 %v1996
    %2005 = vmatprep.subr.bf16.mxu0 0
    %2006 = vmatpush1.bf16.msra.mxu0 %v1997
    %2007 = vmatprep.subr.bf16.mxu0 0
    %2008 = vmatpush1.bf16.msra.mxu0 0
    %2009 = vmatprep.subr.bf16.mxu0 0
    %2010 = vmatpush1.bf16.msra.mxu0 0
    %2011 = vmatprep.subr.bf16.mxu0 0
    %2012 = vmatpush1.bf16.msra.mxu0 0
    %2013 = vmatprep.subr.bf16.mxu0 0
    %2014 = vmatpush1.bf16.msra.mxu0 0
    %2015 = vmatprep.subr.bf16.mxu0 0
    %2016 = vmatpush1.bf16.msra.mxu0 0
    %2017 = vmatprep.subr.bf16.mxu0 0
    %2018 = vmatpush1.bf16.msra.mxu0 0
    %2019 = vmatprep.subr.bf16.mxu0 0
    %2020 = vmatpush1.bf16.msra.mxu0 0
    %2021 = vmatprep.subr.bf16.mxu0 0
    %2022 = vmatpush1.bf16.msra.mxu0 0
    %2023 = vmatprep.subr.bf16.mxu0 0
    %2024 = vmatpush1.bf16.msra.mxu0 0
    %2025 = vmatprep.subr.bf16.mxu0 0
    %2026 = vmatpush1.bf16.msra.mxu0 0
    %2027 = vmatprep.subr.bf16.mxu0 0
    %2028 = vmatpush1.bf16.msra.mxu0 0
    %2029 = vmatprep.subr.bf16.mxu0 0
    %2030 = vmatpush1.bf16.msra.mxu0 0
    %2031 = vmatprep.subr.bf16.mxu0 0
    %2032 = vmatpush1.bf16.msra.mxu0 0
    %2033 = vmatprep.subr.bf16.mxu0 0
    %2034 = vmatpush1.bf16.msra.mxu0 0
    %2035 = vmatprep.mubr.bf16.mxu0 0
    %2036 = vmatmul.mubr.bf16.gmra.mrb[0].mxu0 %v2001
    %v2037 = vpop.f32.mrb[0].mxu0
    %v2038 = vadd.f32 %v1987, %v2037
    %v2039 = vpop.f32.mrb[0].mxu0
    %v2040 = vpop.f32.mrb[0].mxu0
    %v2041 = vpop.f32.mrb[0].mxu0
    %2042 = vdwg.mxu0
    %v2043 = vtanh.pop %v2038
    %v2044 = vpack.c.bf16 %v2043, %v2043
    %v2045 = vld [vmem:[%s3 + $0x3] sm:$0x1]
    %v2046 = vlaneseq
    %v2047 = vshrl.u32 %v2046, 7
    %v2048 = vsub.s32 0, %v2047
    %v2049 = vrot.slane %v2045, %v2048
    %v2054 = vunpack.c.l.b16 %v1978
    %v2055 = vunpack.c.h.b16 %v1978
    %v2056 = vunpack.c.l.b16 %v1979
    %v2057 = vunpack.c.h.b16 %v1979
    %v2058 = vunpack.c.l.b16 %v1980
    %v2059 = vunpack.c.h.b16 %v1980
    %v2060 = vunpack.c.l.b16 %v1981
    %v2061 = vunpack.c.h.b16 %v1981
    %v2062 = vpack.c.b16 %v2056, %v2054
    %v2063 = vpack.c.b16 %v2057, %v2055
    %v2064 = vpack.c.b16 %v2060, %v2058
    %v2065 = vpack.c.b16 %v2061, %v2059
    %2066 = vrot.lane.b32.xlu0 %v2062, 96
    %v2067 = vpop.permute.xlu0 %2066
    %2068 = vrot.lane.b32.xlu0 %v2063, 96
    %v2069 = vpop.permute.xlu0 %2068
    %2070 = vrot.lane.b32.xlu0 %v2064, 96
    %v2071 = vpop.permute.xlu0 %2070
    %2072 = vrot.lane.b32.xlu0 %v2065, 96
    %v2073 = vpop.permute.xlu0 %2072
    %vm2074 = vcmask 785408
    %v2075 = vsel %vm2074, %v2067, %v2069
    %v2076 = vsel %vm2074, %v2071, %v2073
    %v2080 = vsel %vm203, %v2044, 0
    %2082 = vmatprep.subr.bf16.mxu0 0
    %2083 = vmatpush1.bf16.msra.mxu0 %v2075
    %2084 = vmatprep.subr.bf16.mxu0 0
    %2085 = vmatpush1.bf16.msra.mxu0 %v2076
    %2086 = vmatprep.subr.bf16.mxu0 0
    %2087 = vmatpush1.bf16.msra.mxu0 0
    %2088 = vmatprep.subr.bf16.mxu0 0
    %2089 = vmatpush1.bf16.msra.mxu0 0
    %2090 = vmatprep.subr.bf16.mxu0 0
    %2091 = vmatpush1.bf16.msra.mxu0 0
    %2092 = vmatprep.subr.bf16.mxu0 0
    %2093 = vmatpush1.bf16.msra.mxu0 0
    %2094 = vmatprep.subr.bf16.mxu0 0
    %2095 = vmatpush1.bf16.msra.mxu0 0
    %2096 = vmatprep.subr.bf16.mxu0 0
    %2097 = vmatpush1.bf16.msra.mxu0 0
    %2098 = vmatprep.subr.bf16.mxu0 0
    %2099 = vmatpush1.bf16.msra.mxu0 0
    %2100 = vmatprep.subr.bf16.mxu0 0
    %2101 = vmatpush1.bf16.msra.mxu0 0
    %2102 = vmatprep.subr.bf16.mxu0 0
    %2103 = vmatpush1.bf16.msra.mxu0 0
    %2104 = vmatprep.subr.bf16.mxu0 0
    %2105 = vmatpush1.bf16.msra.mxu0 0
    %2106 = vmatprep.subr.bf16.mxu0 0
    %2107 = vmatpush1.bf16.msra.mxu0 0
    %2108 = vmatprep.subr.bf16.mxu0 0
    %2109 = vmatpush1.bf16.msra.mxu0 0
    %2110 = vmatprep.subr.bf16.mxu0 0
    %2111 = vmatpush1.bf16.msra.mxu0 0
    %2112 = vmatprep.subr.bf16.mxu0 0
    %2113 = vmatpush1.bf16.msra.mxu0 0
    %2114 = vmatprep.mubr.bf16.mxu0 0
    %2115 = vmatmul.mubr.bf16.gmra.mrb[0].mxu0 %v2080
    %v2116 = vpop.f32.mrb[0].mxu0
    %v2117 = vadd.f32 %v2049, %v2116
    %v2118 = vpop.f32.mrb[0].mxu0
    %v2119 = vpop.f32.mrb[0].mxu0
    %v2120 = vpop.f32.mrb[0].mxu0
    %2121 = vdwg.mxu0
    %2122 = vst [vmem:[%s5] sm:$0xff] %v2117
    // Predicated region
    $region26: #{bert_for_multilabel_forward.1} parent=1 // pred_check
      _
    $region27: #{bert_for_multilabel_forward.1} parent=1 // pred_check_branch
      %2124 = sbr.rel (0) target = $region29
    $region28: #{bert_for_multilabel_forward.1} parent=1 // pred_region
      _
    $region29: #{bert_for_multilabel_forward.1} parent=1 // pred_fallthru
      _
    // Predicated region
    $region30: #{bert_for_multilabel_forward.1} parent=1 // pred_check
      _
    $region31: #{bert_for_multilabel_forward.1} parent=1 // pred_check_branch
      %2126 = sbr.rel (0) target = $region33
    $region32: #{bert_for_multilabel_forward.1} parent=1 // pred_region
      _
    $region33: #{bert_for_multilabel_forward.1} parent=1 // pred_fallthru
      _
    %2127 = vsyncpa [#allocation4], 1

</llo_original>
